<compile_context>
chip_gen: v7x
topology: tpu7x:2x2x1
jax: 0.10.0
libtpu: 0.0.40
codegen_flags: <defaults>
</compile_context>

<pallas_src>
import functools

import jax
import jax.numpy as jnp
import numpy as np
from jax.experimental import pallas as pl
from jax.experimental.pallas import tpu as pltpu


ACT = {
    "tanh": jnp.tanh,
    "relu": lambda x: jnp.maximum(x, 0.0),
    "leaky_relu": lambda x: jnp.where(x >= 0, x, 0.01 * x),
    "softplus": jax.nn.softplus,
    "exp": jnp.exp,
}

LANE = 128


def _pad_to(n, m):
    return ((n + m - 1) // m) * m


# --------------------------- Pallas kernels ---------------------------------


def _conv_pool_act_kernel(patches_ref, w_ref, b_ref, o_ref, *, n_rows, act_name):
    # patches_ref: (4*n_rows, Kpad)  rows ordered (pool-slot, image, pooled pos)
    # w_ref:       (Kpad, Cpad)      conv weight as a padded matmul operand
    # b_ref:       (1, Cpad)
    # o_ref:       (n_rows, Cpad)    act(maxpool(conv(x))), lane-dense store
    y = jnp.dot(patches_ref[...], w_ref[...], preferred_element_type=jnp.float32)
    # 2x2 max-pool == max over the 4 pool-slot row groups (aligned static slices)
    pooled = jnp.maximum(
        jnp.maximum(y[0:n_rows], y[n_rows:2 * n_rows]),
        jnp.maximum(y[2 * n_rows:3 * n_rows], y[3 * n_rows:4 * n_rows]))
    # bias is per-channel constant, so it distributes over the max: add once.
    o_ref[...] = ACT[act_name](pooled + b_ref[...]).astype(o_ref.dtype)


def conv_pool_act(patches, w, b, n_rows, act_name):
    cpad = w.shape[1]
    return pl.pallas_call(
        functools.partial(_conv_pool_act_kernel, n_rows=n_rows, act_name=act_name),
        out_shape=jax.ShapeDtypeStruct((n_rows, cpad), jnp.float32),
        grid=(1,),
        in_specs=[pl.BlockSpec(patches.shape, lambda i: (0, 0)),
                  pl.BlockSpec(w.shape, lambda i: (0, 0)),
                  pl.BlockSpec(b.shape, lambda i: (0, 0))],
        out_specs=pl.BlockSpec((n_rows, cpad), lambda i: (0, 0)),
        compiler_params=pltpu.CompilerParams(dimension_semantics=("arbitrary",)),
    )(patches, w, b)


def _conv2_mlp_kernel(*refs, n_hidden, bpad, p2n, c2pad, act_name):
    # refs = (patches, w2, b2, fc1_w, fc1_b, ..., out_w, out_b, o_ref)
    patches_ref, w2_ref, b2_ref = refs[0], refs[1], refs[2]
    o_ref = refs[-1]
    wb = refs[3:-1]
    act = ACT[act_name]
    nconv = bpad * p2n

    # conv2: pool-slots x positions x images all folded into one matmul's rows.
    y = jnp.dot(patches_ref[...], w2_ref[...], preferred_element_type=jnp.float32)
    # 2x2 max-pool over the 4 slot row-groups; bias once after the max.
    pooled = jnp.maximum(
        jnp.maximum(y[0:nconv], y[nconv:2 * nconv]),
        jnp.maximum(y[2 * nconv:3 * nconv], y[3 * nconv:4 * nconv]))
    h = act(pooled + b2_ref[...])        # (p2n*bpad, c2pad), rows = (position, image)

    # First FC layer: fold the p2n pooled spatial positions straight into its
    # matmul (weights permuted/padded at init).  This also performs PyTorch's
    # NCHW .view() flatten without any transpose or reshape in the kernel.
    w1 = wb[0][...]
    h1 = jnp.dot(h[0:bpad], w1[0:c2pad, :], preferred_element_type=jnp.float32)
    for p in range(1, p2n):
        h1 = h1 + jnp.dot(h[p * bpad:(p + 1) * bpad],
                          w1[p * c2pad:(p + 1) * c2pad, :],
                          preferred_element_type=jnp.float32)
    h1 = act(h1 + wb[1][...])

    # Remaining hidden layers + final layer, all resident in VMEM.
    for i in range(1, n_hidden):
        h1 = act(jnp.dot(h1, wb[2 * i][...], preferred_element_type=jnp.float32)
                 + wb[2 * i + 1][...])
    wo, bo = wb[2 * n_hidden][...], wb[2 * n_hidden + 1][...]
    o_ref[...] = (jnp.dot(h1, wo, preferred_element_type=jnp.float32)
                  + bo).astype(o_ref.dtype)


def conv2_mlp_fused(patches, w2, b2, mlp_wb, bpad, p2n, act_name):
    flat = [t for pair in mlp_wb for t in pair]
    args = [patches, w2, b2] + flat
    n_hidden = len(mlp_wb) - 1
    c2pad = w2.shape[1]
    dpad = mlp_wb[-1][0].shape[1]
    return pl.pallas_call(
        functools.partial(_conv2_mlp_kernel, n_hidden=n_hidden, bpad=bpad,
                          p2n=p2n, c2pad=c2pad, act_name=act_name),
        out_shape=jax.ShapeDtypeStruct((bpad, dpad), jnp.float32),
        grid=(1,),
        in_specs=[pl.BlockSpec(a.shape, lambda i: (0, 0)) for a in args],
        out_specs=pl.BlockSpec((bpad, dpad), lambda i: (0, 0)),
        compiler_params=pltpu.CompilerParams(dimension_semantics=("arbitrary",)),
    )(*args)


# --------------------------- host-side glue ---------------------------------


def _extract_pool_grouped_patches(fmap, kernel=5, pool=2):
    """fmap: (B, H, W, C). Returns (B, 4, PH*PW, kernel*kernel*C), (PH, PW)."""
    B, H, W, C = fmap.shape
    OH, OW = H - kernel + 1, W - kernel + 1
    PH, PW = OH // pool, OW // pool
    slabs = []
    for kh in range(kernel):
        for kw in range(kernel):
            slabs.append(fmap[:, kh:kh + OH, kw:kw + OW, :])
    patches = jnp.stack(slabs, axis=3)                       # (B, OH, OW, k*k, C)
    patches = patches.reshape(B, OH, OW, kernel * kernel * C)
    patches = patches[:, :PH * pool, :PW * pool, :]          # region covered by pool
    patches = patches.reshape(B, PH, pool, PW, pool, kernel * kernel * C)
    patches = patches.transpose(0, 2, 4, 1, 3, 5)            # (B, dh, dw, PH, PW, K)
    patches = patches.reshape(B, pool * pool, PH * PW, kernel * kernel * C)
    return patches, (PH, PW)


def digit_cnn_forward(x, params, act_name="relu"):
    # x: (num_traj, num_obs, 1, H, W) float32, NCHW like PyTorch.
    nt, no = x.shape[:2]
    B = nt * no
    xb = x.reshape(B, *x.shape[2:])                  # (B, 1, H, W)
    fmap = jnp.transpose(xb, (0, 2, 3, 1))           # (B, H, W, 1) channels-last

    c1 = params["conv1_w"].shape[0]                  # 10
    dim_out = params["lin_raw"][-1][0].shape[0]

    # conv1 (1->10, k=5) + maxpool(2) + act: ONE Pallas call, batch folded in rows
    p1, (ph1, pw1) = _extract_pool_grouped_patches(fmap)     # (B, 4, P1, 25)
    P1 = ph1 * pw1
    k1pad = params["conv1_wmat"].shape[0]
    p1 = jnp.pad(p1, ((0, 0), (0, 0), (0, 0), (0, k1pad - p1.shape[-1])))
    p1 = jnp.transpose(p1, (1, 0, 2, 3)).reshape(4 * B * P1, k1pad)
    f1 = conv_pool_act(p1, params["conv1_wmat"], params["conv1_b"], B * P1, act_name)
    fmap1 = f1.reshape(B, ph1, pw1, -1)[..., :c1]            # (B, 8, 8, 10)

    # conv2 (10->20, k=5) + [dropout2d=identity] + maxpool(2) + act + flatten
    # + full MLP: ONE fused Pallas call.
    # TODO(synk): F.dropout2d is identity in eval mode; training-mode channel
    # dropout is not implemented.
    p2, (ph2, pw2) = _extract_pool_grouped_patches(fmap1)    # (B, 4, P2, 250)
    P2 = ph2 * pw2
    k2pad = params["conv2_wmat"].shape[0]
    bpad = _pad_to(B, 8)                                     # keep row slices aligned
    p2 = jnp.pad(p2, ((0, bpad - B), (0, 0), (0, 0), (0, k2pad - p2.shape[-1])))
    p2 = jnp.transpose(p2, (1, 2, 0, 3)).reshape(4 * P2 * bpad, k2pad)
    out_pad = conv2_mlp_fused(p2, params["conv2_wmat"], params["conv2_b"],
                              params["mlp"], bpad, P2, act_name)

    out = out_pad[:B, :dim_out]
    return out.reshape(nt, no, dim_out)


# --------------------------- parameters -------------------------------------


def init_params(key, image_size, hidden_layers, dim_out):
    def conv_size(s, k=5, st=1):
        return (s - (k - 1) - 1) // st + 1

    def pool_size(s, k=2):
        return conv_size(s, k, k)

    image_out = pool_size(conv_size(pool_size(conv_size(image_size))))
    P2 = image_out * image_out
    linear_input_size = P2 * 20

    keys = iter(jax.random.split(key, 4 + 2 * (len(hidden_layers) + 1)))

    def uniform(k, shape, fan_in):
        bound = 1.0 / np.sqrt(fan_in)
        return jax.random.uniform(k, shape, jnp.float32, -bound, bound)

    w1 = uniform(next(keys), (10, 1, 5, 5), 1 * 25)
    b1 = uniform(next(keys), (10,), 1 * 25)
    w2 = uniform(next(keys), (20, 10, 5, 5), 10 * 25)
    b2 = uniform(next(keys), (20,), 10 * 25)

    k1pad = _pad_to(25, LANE)        # 128  (conv1 contraction dim)
    k2pad = _pad_to(250, LANE)       # 256  (conv2 contraction dim)
    c1pad = _pad_to(10, LANE)        # 128  (lane-dense conv1 channels)
    c2pad = _pad_to(20, LANE)        # 128  (lane-dense conv2 channels)

    # conv weights as matmul operands, matching (kh, kw, ci)-ordered patch cols
    wmat1 = jnp.transpose(w1, (0, 2, 3, 1)).reshape(10, -1).T          # (25, 10)
    wmat2 = jnp.transpose(w2, (0, 2, 3, 1)).reshape(20, -1).T          # (250, 20)

    params = {
        "conv1_w": w1, "conv1_b_raw": b1,
        "conv2_w": w2, "conv2_b_raw": b2,
        "conv1_wmat": jnp.zeros((k1pad, c1pad), jnp.float32).at[:25, :10].set(wmat1),
        "conv1_b": jnp.zeros((1, c1pad), jnp.float32).at[0, :10].set(b1),
        "conv2_wmat": jnp.zeros((k2pad, c2pad), jnp.float32).at[:250, :20].set(wmat2),
        "conv2_b": jnp.zeros((1, c2pad), jnp.float32).at[0, :20].set(b2),
    }

    dims = [linear_input_size] + list(hidden_layers) + [dim_out]
    pad_dims = [P2 * c2pad] + [_pad_to(d, LANE) for d in dims[1:]]
    lin_raw = []
    for i in range(len(dims) - 1):
        w = uniform(next(keys), (dims[i + 1], dims[i]), dims[i])
        b = uniform(next(keys), (dims[i + 1],), dims[i])
        lin_raw.append((w, b))

    # First FC layer: permute rows to consume the conv2 kernel's layout directly
    # (PyTorch flatten index is c*P2 + p; kernel lane index is p*c2pad + c).
    w0, b0 = lin_raw[0]
    h1 = dims[1]
    w0r = jnp.transpose(w0.reshape(h1, 20, P2), (2, 1, 0))             # (P2, 20, H1)
    w0p = jnp.zeros((P2, c2pad, pad_dims[1]), jnp.float32).at[:, :20, :h1].set(w0r)
    mlp = [(w0p.reshape(P2 * c2pad, pad_dims[1]),
            jnp.zeros((1, pad_dims[1]), jnp.float32).at[0, :h1].set(b0))]
    for i in range(1, len(dims) - 1):
        w, b = lin_raw[i]
        wp = jnp.zeros((pad_dims[i], pad_dims[i + 1]), jnp.float32
                       ).at[:dims[i], :dims[i + 1]].set(w.T)
        bpd = jnp.zeros((1, pad_dims[i + 1]), jnp.float32).at[0, :dims[i + 1]].set(b)
        mlp.append((wp, bpd))

    params["mlp"] = mlp
    params["lin_raw"] = lin_raw
    return params


# --------------------------- pure-JAX reference ------------------------------


def reference_forward(x, params, act_name):
    act = ACT[act_name]
    nt, no = x.shape[:2]
    xb = x.reshape(nt * no, *x.shape[2:])

    def conv(v, w, b):
        y = jax.lax.conv_general_dilated(
            v, w, window_strides=(1, 1), padding="VALID",
            dimension_numbers=("NCHW", "OIHW", "NCHW"),
            precision=jax.lax.Precision.HIGHEST)
        return y + b[None, :, None, None]

    def maxpool2(v):
        return jax.lax.reduce_window(v, -jnp.inf, jax.lax.max,
                                     (1, 1, 2, 2), (1, 1, 2, 2), "VALID")

    d = act(maxpool2(conv(xb, params["conv1_w"], params["conv1_b_raw"])))
    d = act(maxpool2(conv(d, params["conv2_w"], params["conv2_b_raw"])))
    d = d.reshape(nt, no, -1)
    lin = params["lin_raw"]
    for w, b in lin[:-1]:
        d = act(jnp.matmul(d, w.T, precision=jax.lax.Precision.HIGHEST) + b)
    w, b = lin[-1]
    return jnp.matmul(d, w.T, precision=jax.lax.Precision.HIGHEST) + b


# --------------------------- main --------------------------------------------


if __name__ == "__main__":
    num_traj, num_obs = 2, 3
    image_size = 20                    # 20 -> conv 16 -> pool 8 -> conv 4 -> pool 2
    hidden_layers = [32, 16]
    dim_out = 8
    act_name = "relu"

    key = jax.random.PRNGKey(0)
    k_x, k_p = jax.random.split(key)
    x = jax.random.normal(
        k_x, (num_traj, num_obs, 1, image_size, image_size), jnp.float32)
    params = init_params(k_p, image_size, hidden_layers, dim_out)

    fwd = jax.jit(functools.partial(digit_cnn_forward, act_name=act_name))
    out = jax.block_until_ready(fwd(x, params))

    assert out.shape == (num_traj, num_obs, dim_out)
    ref = reference_forward(x, params, act_name)
    np.testing.assert_allclose(np.asarray(out), np.asarray(ref),
                               rtol=2e-2, atol=2e-2)
    print("KERNEL_OK")
</pallas_src>

<mosaic_0001>
module attributes {stable_mosaic.version = 11 : i64} {
  func.func @_conv_pool_act_kernel(%arg0: i32, %arg1: memref<1536x128xf32, #tpu.memory_space<vmem>>, %arg2: memref<128x128xf32, #tpu.memory_space<vmem>>, %arg3: memref<1x128xf32, #tpu.memory_space<vmem>>, %arg4: memref<384x128xf32, #tpu.memory_space<vmem>>) attributes {dimension_semantics = [#tpu.dimension_semantics<arbitrary>], iteration_bounds = array<i64: 1>, scalar_prefetch = 0 : i64, scratch_operands = 0 : i64, tpu.core_type = #tpu.core_type<tc>, window_params = [{pipeline_mode = #tpu.pipeline_mode<synchronous>, transform_indices = @transform_0, window_bounds = array<i64: 1536, 128>}, {pipeline_mode = #tpu.pipeline_mode<synchronous>, transform_indices = @transform_1, window_bounds = array<i64: 128, 128>}, {pipeline_mode = #tpu.pipeline_mode<synchronous>, transform_indices = @transform_2, window_bounds = array<i64: 1, 128>}, {pipeline_mode = #tpu.pipeline_mode<synchronous>, transform_indices = @transform_3, window_bounds = array<i64: 384, 128>}]} {
    %c0 = arith.constant 0 : index
    %c0_0 = arith.constant 0 : index
    %0 = vector.load %arg1[%c0, %c0_0] : memref<1536x128xf32, #tpu.memory_space<vmem>>, vector<1536x128xf32>
    %c0_1 = arith.constant 0 : index
    %c0_2 = arith.constant 0 : index
    %1 = vector.load %arg2[%c0_1, %c0_2] : memref<128x128xf32, #tpu.memory_space<vmem>>, vector<128x128xf32>
    %cst = arith.constant dense<0.000000e+00> : vector<1536x128xf32>
    %2 = tpu.matmul %0, %1, %cst {dimension_numbers = #tpu.dot_dimension_numbers<[1], [0], [0], [1], [0, 0, 1, 1], [], []>} : vector<1536x128xf32>, vector<128x128xf32>, vector<1536x128xf32> -> vector<1536x128xf32>
    %3 = vector.extract_strided_slice %2 {offsets = [0, 0], sizes = [384, 128], strides = [1, 1]} : vector<1536x128xf32> to vector<384x128xf32>
    %4 = vector.extract_strided_slice %2 {offsets = [384, 0], sizes = [384, 128], strides = [1, 1]} : vector<1536x128xf32> to vector<384x128xf32>
    %5 = arith.maximumf %3, %4 : vector<384x128xf32>
    %6 = vector.extract_strided_slice %2 {offsets = [768, 0], sizes = [384, 128], strides = [1, 1]} : vector<1536x128xf32> to vector<384x128xf32>
    %7 = vector.extract_strided_slice %2 {offsets = [1152, 0], sizes = [384, 128], strides = [1, 1]} : vector<1536x128xf32> to vector<384x128xf32>
    %8 = arith.maximumf %6, %7 : vector<384x128xf32>
    %9 = arith.maximumf %5, %8 : vector<384x128xf32>
    %c0_3 = arith.constant 0 : index
    %c0_4 = arith.constant 0 : index
    %10 = vector.load %arg3[%c0_3, %c0_4] : memref<1x128xf32, #tpu.memory_space<vmem>>, vector<1x128xf32>
    %11 = vector.broadcast %10 : vector<1x128xf32> to vector<384x128xf32>
    %12 = arith.addf %9, %11 : vector<384x128xf32>
    %cst_5 = arith.constant 0.000000e+00 : f32
    %13 = vector.broadcast %cst_5 : f32 to vector<384x128xf32>
    %14 = arith.maximumf %12, %13 : vector<384x128xf32>
    %c0_6 = arith.constant 0 : index
    %c0_7 = arith.constant 0 : index
    %15 = vector.load %arg4[%c0_6, %c0_7] : memref<384x128xf32, #tpu.memory_space<vmem>>, vector<384x128xf32>
    tpu.vector_store %arg4[%c0_6, %c0_7], %14 {strides = array<i32>} : memref<384x128xf32, #tpu.memory_space<vmem>>, vector<384x128xf32>,
    return
  }
  func.func @transform_0(%arg0: i32) -> (i32, i32) {
    %c0_i32 = arith.constant 0 : i32
    %c0_i32_0 = arith.constant 0 : i32
    %c0_i32_1 = arith.constant 0 : i32
    return %c0_i32, %c0_i32_0 : i32, i32
  }
  func.func @transform_1(%arg0: i32) -> (i32, i32) {
    %c0_i32 = arith.constant 0 : i32
    %c0_i32_0 = arith.constant 0 : i32
    %c0_i32_1 = arith.constant 0 : i32
    return %c0_i32, %c0_i32_0 : i32, i32
  }
  func.func @transform_2(%arg0: i32) -> (i32, i32) {
    %c0_i32 = arith.constant 0 : i32
    %c0_i32_0 = arith.constant 0 : i32
    %c0_i32_1 = arith.constant 0 : i32
    return %c0_i32, %c0_i32_0 : i32, i32
  }
  func.func @transform_3(%arg0: i32) -> (i32, i32) {
    %c0_i32 = arith.constant 0 : i32
    %c0_i32_0 = arith.constant 0 : i32
    %c0_i32_1 = arith.constant 0 : i32
    return %c0_i32, %c0_i32_0 : i32, i32
  }
}

module attributes {stable_mosaic.version = 11 : i64} {
  func.func @_conv2_mlp_kernel(%arg0: i32, %arg1: memref<128x256xf32, #tpu.memory_space<vmem>>, %arg2: memref<256x128xf32, #tpu.memory_space<vmem>>, %arg3: memref<1x128xf32, #tpu.memory_space<vmem>>, %arg4: memref<512x128xf32, #tpu.memory_space<vmem>>, %arg5: memref<1x128xf32, #tpu.memory_space<vmem>>, %arg6: memref<128x128xf32, #tpu.memory_space<vmem>>, %arg7: memref<1x128xf32, #tpu.memory_space<vmem>>, %arg8: memref<128x128xf32, #tpu.memory_space<vmem>>, %arg9: memref<1x128xf32, #tpu.memory_space<vmem>>, %arg10: memref<8x128xf32, #tpu.memory_space<vmem>>) attributes {dimension_semantics = [#tpu.dimension_semantics<arbitrary>], iteration_bounds = array<i64: 1>, scalar_prefetch = 0 : i64, scratch_operands = 0 : i64, tpu.core_type = #tpu.core_type<tc>, window_params = [{pipeline_mode = #tpu.pipeline_mode<synchronous>, transform_indices = @transform_0, window_bounds = array<i64: 128, 256>}, {pipeline_mode = #tpu.pipeline_mode<synchronous>, transform_indices = @transform_1, window_bounds = array<i64: 256, 128>}, {pipeline_mode = #tpu.pipeline_mode<synchronous>, transform_indices = @transform_2, window_bounds = array<i64: 1, 128>}, {pipeline_mode = #tpu.pipeline_mode<synchronous>, transform_indices = @transform_3, window_bounds = array<i64: 512, 128>}, {pipeline_mode = #tpu.pipeline_mode<synchronous>, transform_indices = @transform_4, window_bounds = array<i64: 1, 128>}, {pipeline_mode = #tpu.pipeline_mode<synchronous>, transform_indices = @transform_5, window_bounds = array<i64: 128, 128>}, {pipeline_mode = #tpu.pipeline_mode<synchronous>, transform_indices = @transform_6, window_bounds = array<i64: 1, 128>}, {pipeline_mode = #tpu.pipeline_mode<synchronous>, transform_indices = @transform_7, window_bounds = array<i64: 128, 128>}, {pipeline_mode = #tpu.pipeline_mode<synchronous>, transform_indices = @transform_8, window_bounds = array<i64: 1, 128>}, {pipeline_mode = #tpu.pipeline_mode<synchronous>, transform_indices = @transform_9, window_bounds = array<i64: 8, 128>}]} {
    %c0 = arith.constant 0 : index
    %c0_0 = arith.constant 0 : index
    %0 = vector.load %arg1[%c0, %c0_0] : memref<128x256xf32, #tpu.memory_space<vmem>>, vector<128x256xf32>
    %c0_1 = arith.constant 0 : index
    %c0_2 = arith.constant 0 : index
    %1 = vector.load %arg2[%c0_1, %c0_2] : memref<256x128xf32, #tpu.memory_space<vmem>>, vector<256x128xf32>
    %cst = arith.constant dense<0.000000e+00> : vector<128x128xf32>
    %2 = tpu.matmul %0, %1, %cst {dimension_numbers = #tpu.dot_dimension_numbers<[1], [0], [0], [1], [0, 0, 1, 1], [], []>} : vector<128x256xf32>, vector<256x128xf32>, vector<128x128xf32> -> vector<128x128xf32>
    %3 = vector.extract_strided_slice %2 {offsets = [0, 0], sizes = [32, 128], strides = [1, 1]} : vector<128x128xf32> to vector<32x128xf32>
    %4 = vector.extract_strided_slice %2 {offsets = [32, 0], sizes = [32, 128], strides = [1, 1]} : vector<128x128xf32> to vector<32x128xf32>
    %5 = arith.maximumf %3, %4 : vector<32x128xf32>
    %6 = vector.extract_strided_slice %2 {offsets = [64, 0], sizes = [32, 128], strides = [1, 1]} : vector<128x128xf32> to vector<32x128xf32>
    %7 = vector.extract_strided_slice %2 {offsets = [96, 0], sizes = [32, 128], strides = [1, 1]} : vector<128x128xf32> to vector<32x128xf32>
    %8 = arith.maximumf %6, %7 : vector<32x128xf32>
    %9 = arith.maximumf %5, %8 : vector<32x128xf32>
    %c0_3 = arith.constant 0 : index
    %c0_4 = arith.constant 0 : index
    %10 = vector.load %arg3[%c0_3, %c0_4] : memref<1x128xf32, #tpu.memory_space<vmem>>, vector<1x128xf32>
    %11 = vector.broadcast %10 : vector<1x128xf32> to vector<32x128xf32>
    %12 = arith.addf %9, %11 : vector<32x128xf32>
    %cst_5 = arith.constant 0.000000e+00 : f32
    %13 = vector.broadcast %cst_5 : f32 to vector<32x128xf32>
    %14 = arith.maximumf %12, %13 : vector<32x128xf32>
    %c0_6 = arith.constant 0 : index
    %c0_7 = arith.constant 0 : index
    %15 = vector.load %arg4[%c0_6, %c0_7] : memref<512x128xf32, #tpu.memory_space<vmem>>, vector<512x128xf32>
    %16 = vector.extract_strided_slice %14 {offsets = [0, 0], sizes = [8, 128], strides = [1, 1]} : vector<32x128xf32> to vector<8x128xf32>
    %17 = vector.extract_strided_slice %15 {offsets = [0, 0], sizes = [128, 128], strides = [1, 1]} : vector<512x128xf32> to vector<128x128xf32>
    %cst_8 = arith.constant dense<0.000000e+00> : vector<8x128xf32>
    %18 = tpu.matmul %16, %17, %cst_8 {dimension_numbers = #tpu.dot_dimension_numbers<[1], [0], [0], [1], [0, 0, 1, 1], [], []>} : vector<8x128xf32>, vector<128x128xf32>, vector<8x128xf32> -> vector<8x128xf32>
    %19 = vector.extract_strided_slice %14 {offsets = [8, 0], sizes = [8, 128], strides = [1, 1]} : vector<32x128xf32> to vector<8x128xf32>
    %20 = vector.extract_strided_slice %15 {offsets = [128, 0], sizes = [128, 128], strides = [1, 1]} : vector<512x128xf32> to vector<128x128xf32>
    %cst_9 = arith.constant dense<0.000000e+00> : vector<8x128xf32>
    %21 = tpu.matmul %19, %20, %cst_9 {dimension_numbers = #tpu.dot_dimension_numbers<[1], [0], [0], [1], [0, 0, 1, 1], [], []>} : vector<8x128xf32>, vector<128x128xf32>, vector<8x128xf32> -> vector<8x128xf32>
    %22 = arith.addf %18, %21 : vector<8x128xf32>
    %23 = vector.extract_strided_slice %14 {offsets = [16, 0], sizes = [8, 128], strides = [1, 1]} : vector<32x128xf32> to vector<8x128xf32>
    %24 = vector.extract_strided_slice %15 {offsets = [256, 0], sizes = [128, 128], strides = [1, 1]} : vector<512x128xf32> to vector<128x128xf32>
    %cst_10 = arith.constant dense<0.000000e+00> : vector<8x128xf32>
    %25 = tpu.matmul %23, %24, %cst_10 {dimension_numbers = #tpu.dot_dimension_numbers<[1], [0], [0], [1], [0, 0, 1, 1], [], []>} : vector<8x128xf32>, vector<128x128xf32>, vector<8x128xf32> -> vector<8x128xf32>
    %26 = arith.addf %22, %25 : vector<8x128xf32>
    %27 = vector.extract_strided_slice %14 {offsets = [24, 0], sizes = [8, 128], strides = [1, 1]} : vector<32x128xf32> to vector<8x128xf32>
    %28 = vector.extract_strided_slice %15 {offsets = [384, 0], sizes = [128, 128], strides = [1, 1]} : vector<512x128xf32> to vector<128x128xf32>
    %cst_11 = arith.constant dense<0.000000e+00> : vector<8x128xf32>
    %29 = tpu.matmul %27, %28, %cst_11 {dimension_numbers = #tpu.dot_dimension_numbers<[1], [0], [0], [1], [0, 0, 1, 1], [], []>} : vector<8x128xf32>, vector<128x128xf32>, vector<8x128xf32> -> vector<8x128xf32>
    %30 = arith.addf %26, %29 : vector<8x128xf32>
    %c0_12 = arith.constant 0 : index
    %c0_13 = arith.constant 0 : index
    %31 = vector.load %arg5[%c0_12, %c0_13] : memref<1x128xf32, #tpu.memory_space<vmem>>, vector<1x128xf32>
    %32 = vector.broadcast %31 : vector<1x128xf32> to vector<8x128xf32>
    %33 = arith.addf %30, %32 : vector<8x128xf32>
    %cst_14 = arith.constant 0.000000e+00 : f32
    %34 = vector.broadcast %cst_14 : f32 to vector<8x128xf32>
    %35 = arith.maximumf %33, %34 : vector<8x128xf32>
    %c0_15 = arith.constant 0 : index
    %c0_16 = arith.constant 0 : index
    %36 = vector.load %arg6[%c0_15, %c0_16] : memref<128x128xf32, #tpu.memory_space<vmem>>, vector<128x128xf32>
    %cst_17 = arith.constant dense<0.000000e+00> : vector<8x128xf32>
    %37 = tpu.matmul %35, %36, %cst_17 {dimension_numbers = #tpu.dot_dimension_numbers<[1], [0], [0], [1], [0, 0, 1, 1], [], []>} : vector<8x128xf32>, vector<128x128xf32>, vector<8x128xf32> -> vector<8x128xf32>
    %c0_18 = arith.constant 0 : index
    %c0_19 = arith.constant 0 : index
    %38 = vector.load %arg7[%c0_18, %c0_19] : memref<1x128xf32, #tpu.memory_space<vmem>>, vector<1x128xf32>
    %39 = vector.broadcast %38 : vector<1x128xf32> to vector<8x128xf32>
    %40 = arith.addf %37, %39 : vector<8x128xf32>
    %cst_20 = arith.constant 0.000000e+00 : f32
    %41 = vector.broadcast %cst_20 : f32 to vector<8x128xf32>
    %42 = arith.maximumf %40, %41 : vector<8x128xf32>
    %c0_21 = arith.constant 0 : index
    %c0_22 = arith.constant 0 : index
    %43 = vector.load %arg8[%c0_21, %c0_22] : memref<128x128xf32, #tpu.memory_space<vmem>>, vector<128x128xf32>
    %c0_23 = arith.constant 0 : index
    %c0_24 = arith.constant 0 : index
    %44 = vector.load %arg9[%c0_23, %c0_24] : memref<1x128xf32, #tpu.memory_space<vmem>>, vector<1x128xf32>
    %cst_25 = arith.constant dense<0.000000e+00> : vector<8x128xf32>
    %45 = tpu.matmul %42, %43, %cst_25 {dimension_numbers = #tpu.dot_dimension_numbers<[1], [0], [0], [1], [0, 0, 1, 1], [], []>} : vector<8x128xf32>, vector<128x128xf32>, vector<8x128xf32> -> vector<8x128xf32>
    %46 = vector.broadcast %44 : vector<1x128xf32> to vector<8x128xf32>
    %47 = arith.addf %45, %46 : vector<8x128xf32>
    %c0_26 = arith.constant 0 : index
    %c0_27 = arith.constant 0 : index
    %48 = vector.load %arg10[%c0_26, %c0_27] : memref<8x128xf32, #tpu.memory_space<vmem>>, vector<8x128xf32>
    tpu.vector_store %arg10[%c0_26, %c0_27], %47 {strides = array<i32>} : memref<8x128xf32, #tpu.memory_space<vmem>>, vector<8x128xf32>,
    return
  }
  func.func @transform_0(%arg0: i32) -> (i32, i32) {
    %c0_i32 = arith.constant 0 : i32
    %c0_i32_0 = arith.constant 0 : i32
    %c0_i32_1 = arith.constant 0 : i32
    return %c0_i32, %c0_i32_0 : i32, i32
  }
  func.func @transform_1(%arg0: i32) -> (i32, i32) {
    %c0_i32 = arith.constant 0 : i32
    %c0_i32_0 = arith.constant 0 : i32
    %c0_i32_1 = arith.constant 0 : i32
    return %c0_i32, %c0_i32_0 : i32, i32
  }
  func.func @transform_2(%arg0: i32) -> (i32, i32) {
    %c0_i32 = arith.constant 0 : i32
    %c0_i32_0 = arith.constant 0 : i32
    %c0_i32_1 = arith.constant 0 : i32
    return %c0_i32, %c0_i32_0 : i32, i32
  }
  func.func @transform_3(%arg0: i32) -> (i32, i32) {
    %c0_i32 = arith.constant 0 : i32
    %c0_i32_0 = arith.constant 0 : i32
    %c0_i32_1 = arith.constant 0 : i32
    return %c0_i32, %c0_i32_0 : i32, i32
  }
  func.func @transform_4(%arg0: i32) -> (i32, i32) {
    %c0_i32 = arith.constant 0 : i32
    %c0_i32_0 = arith.constant 0 : i32
    %c0_i32_1 = arith.constant 0 : i32
    return %c0_i32, %c0_i32_0 : i32, i32
  }
  func.func @transform_5(%arg0: i32) -> (i32, i32) {
    %c0_i32 = arith.constant 0 : i32
    %c0_i32_0 = arith.constant 0 : i32
    %c0_i32_1 = arith.constant 0 : i32
    return %c0_i32, %c0_i32_0 : i32, i32
  }
  func.func @transform_6(%arg0: i32) -> (i32, i32) {
    %c0_i32 = arith.constant 0 : i32
    %c0_i32_0 = arith.constant 0 : i32
    %c0_i32_1 = arith.constant 0 : i32
    return %c0_i32, %c0_i32_0 : i32, i32
  }
  func.func @transform_7(%arg0: i32) -> (i32, i32) {
    %c0_i32 = arith.constant 0 : i32
    %c0_i32_0 = arith.constant 0 : i32
    %c0_i32_1 = arith.constant 0 : i32
    return %c0_i32, %c0_i32_0 : i32, i32
  }
  func.func @transform_8(%arg0: i32) -> (i32, i32) {
    %c0_i32 = arith.constant 0 : i32
    %c0_i32_0 = arith.constant 0 : i32
    %c0_i32_1 = arith.constant 0 : i32
    return %c0_i32, %c0_i32_0 : i32, i32
  }
  func.func @transform_9(%arg0: i32) -> (i32, i32) {
    %c0_i32 = arith.constant 0 : i32
    %c0_i32_0 = arith.constant 0 : i32
    %c0_i32_1 = arith.constant 0 : i32
    return %c0_i32, %c0_i32_0 : i32, i32
  }
}

</mosaic_0001>

<llo_original>
// kernel: digit_cnn_forward.2
$region0: #{digit_cnn_forward.2}
  #allocation0 [shape = 'u32[]', space=smem, size = 0x4, offset = 0x4, fixed_abs, tag = 'smem constant byte address 0x4 - core index']
  #allocation1 [shape = 'u32[144,128]{1,0:T(1,128)}', space=vmem, size = 0x12000, scoped, tag = 'internal scratch']
  %s0 = inlined_call_operand.vmem [shape: f32[1536,128], index: 0, kind: input, shape index: {}]
  %s1 = inlined_call_operand.vmem [shape: f32[128,128], index: 1, kind: input, shape index: {}]
  %s2 = inlined_call_operand.vmem [shape: f32[1,128], index: 2, kind: input, shape index: {}]
  %s3 = inlined_call_operand.vmem [shape: f32[384,128], index: 3, kind: output, shape index: {}]
  %s4 = sld [smem:[#allocation0]]
  $region22: #{digit_cnn_forward.2} parent=0
    _
  %s6 = ssub.s32 1, %s4
  %s7 = scalar_select 0, %s6, %s4
  // Predicated region
  $region2: #{digit_cnn_forward.2} parent=0 // pred_check
    _
  $region3: #{digit_cnn_forward.2} parent=0 // pred_check_branch
    %9 = sbr.rel (0) target = $region5
  $region4: #{digit_cnn_forward.2} parent=0 // pred_region
    _
  $region5: #{digit_cnn_forward.2} parent=0 // pred_fallthru
    _
  // Predicated region
  $region6: #{digit_cnn_forward.2} parent=0 // pred_check
    _
  $region7: #{digit_cnn_forward.2} parent=0 // pred_check_branch
    %11 = sbr.rel (0) target = $region9
  $region8: #{digit_cnn_forward.2} parent=0 // pred_region
    _
  $region9: #{digit_cnn_forward.2} parent=0 // pred_fallthru
    _
  // Predicated region
  $region10: #{digit_cnn_forward.2} parent=0 // pred_check
    _
  $region11: #{digit_cnn_forward.2} parent=0 // pred_check_branch
    %13 = sbr.rel (0) target = $region13
  $region12: #{digit_cnn_forward.2} parent=0 // pred_region
    _
  $region13: #{digit_cnn_forward.2} parent=0 // pred_fallthru
    _
  %v14 = vld [vmem:[%s0] sm:$0xff]
  %v15 = vld [vmem:[%s0 + $0x8] sm:$0xff]
  %v16 = vld [vmem:[%s0 + $0x10] sm:$0xff]
  %v17 = vld [vmem:[%s0 + $0x18] sm:$0xff]
  %v18 = vld [vmem:[%s0 + $0x20] sm:$0xff]
  %v19 = vld [vmem:[%s0 + $0x28] sm:$0xff]
  %v20 = vld [vmem:[%s0 + $0x30] sm:$0xff]
  %v21 = vld [vmem:[%s0 + $0x38] sm:$0xff]
  %v22 = vld [vmem:[%s0 + $0x40] sm:$0xff]
  %v23 = vld [vmem:[%s0 + $0x48] sm:$0xff]
  %v24 = vld [vmem:[%s0 + $0x50] sm:$0xff]
  %v25 = vld [vmem:[%s0 + $0x58] sm:$0xff]
  %v26 = vld [vmem:[%s0 + $0x60] sm:$0xff]
  %v27 = vld [vmem:[%s0 + $0x68] sm:$0xff]
  %v28 = vld [vmem:[%s0 + $0x70] sm:$0xff]
  %v29 = vld [vmem:[%s0 + $0x78] sm:$0xff]
  %v30 = vld [vmem:[%s0 + $0x80] sm:$0xff]
  %v31 = vld [vmem:[%s0 + $0x88] sm:$0xff]
  %v32 = vld [vmem:[%s0 + $0x90] sm:$0xff]
  %v33 = vld [vmem:[%s0 + $0x98] sm:$0xff]
  %v34 = vld [vmem:[%s0 + $0xa0] sm:$0xff]
  %v35 = vld [vmem:[%s0 + $0xa8] sm:$0xff]
  %v36 = vld [vmem:[%s0 + $0xb0] sm:$0xff]
  %v37 = vld [vmem:[%s0 + $0xb8] sm:$0xff]
  %v38 = vld [vmem:[%s0 + $0xc0] sm:$0xff]
  %v39 = vld [vmem:[%s0 + $0xc8] sm:$0xff]
  %v40 = vld [vmem:[%s0 + $0xd0] sm:$0xff]
  %v41 = vld [vmem:[%s0 + $0xd8] sm:$0xff]
  %v42 = vld [vmem:[%s0 + $0xe0] sm:$0xff]
  %v43 = vld [vmem:[%s0 + $0xe8] sm:$0xff]
  %v44 = vld [vmem:[%s0 + $0xf0] sm:$0xff]
  %v45 = vld [vmem:[%s0 + $0xf8] sm:$0xff]
  %v46 = vld [vmem:[%s0 + $0x100] sm:$0xff]
  %v47 = vld [vmem:[%s0 + $0x108] sm:$0xff]
  %v48 = vld [vmem:[%s0 + $0x110] sm:$0xff]
  %v49 = vld [vmem:[%s0 + $0x118] sm:$0xff]
  %v50 = vld [vmem:[%s0 + $0x120] sm:$0xff]
  %v51 = vld [vmem:[%s0 + $0x128] sm:$0xff]
  %v52 = vld [vmem:[%s0 + $0x130] sm:$0xff]
  %v53 = vld [vmem:[%s0 + $0x138] sm:$0xff]
  %v54 = vld [vmem:[%s0 + $0x140] sm:$0xff]
  %v55 = vld [vmem:[%s0 + $0x148] sm:$0xff]
  %v56 = vld [vmem:[%s0 + $0x150] sm:$0xff]
  %v57 = vld [vmem:[%s0 + $0x158] sm:$0xff]
  %v58 = vld [vmem:[%s0 + $0x160] sm:$0xff]
  %v59 = vld [vmem:[%s0 + $0x168] sm:$0xff]
  %v60 = vld [vmem:[%s0 + $0x170] sm:$0xff]
  %v61 = vld [vmem:[%s0 + $0x178] sm:$0xff]
  %v62 = vld [vmem:[%s0 + $0x180] sm:$0xff]
  %v63 = vld [vmem:[%s0 + $0x188] sm:$0xff]
  %v64 = vld [vmem:[%s0 + $0x190] sm:$0xff]
  %v65 = vld [vmem:[%s0 + $0x198] sm:$0xff]
  %v66 = vld [vmem:[%s0 + $0x1a0] sm:$0xff]
  %v67 = vld [vmem:[%s0 + $0x1a8] sm:$0xff]
  %v68 = vld [vmem:[%s0 + $0x1b0] sm:$0xff]
  %v69 = vld [vmem:[%s0 + $0x1b8] sm:$0xff]
  %v70 = vld [vmem:[%s0 + $0x1c0] sm:$0xff]
  %v71 = vld [vmem:[%s0 + $0x1c8] sm:$0xff]
  %v72 = vld [vmem:[%s0 + $0x1d0] sm:$0xff]
  %v73 = vld [vmem:[%s0 + $0x1d8] sm:$0xff]
  %v74 = vld [vmem:[%s0 + $0x1e0] sm:$0xff]
  %v75 = vld [vmem:[%s0 + $0x1e8] sm:$0xff]
  %v76 = vld [vmem:[%s0 + $0x1f0] sm:$0xff]
  %v77 = vld [vmem:[%s0 + $0x1f8] sm:$0xff]
  %v78 = vld [vmem:[%s0 + $0x200] sm:$0xff]
  %v79 = vld [vmem:[%s0 + $0x208] sm:$0xff]
  %v80 = vld [vmem:[%s0 + $0x210] sm:$0xff]
  %v81 = vld [vmem:[%s0 + $0x218] sm:$0xff]
  %v82 = vld [vmem:[%s0 + $0x220] sm:$0xff]
  %v83 = vld [vmem:[%s0 + $0x228] sm:$0xff]
  %v84 = vld [vmem:[%s0 + $0x230] sm:$0xff]
  %v85 = vld [vmem:[%s0 + $0x238] sm:$0xff]
  %v86 = vld [vmem:[%s0 + $0x240] sm:$0xff]
  %v87 = vld [vmem:[%s0 + $0x248] sm:$0xff]
  %v88 = vld [vmem:[%s0 + $0x250] sm:$0xff]
  %v89 = vld [vmem:[%s0 + $0x258] sm:$0xff]
  %v90 = vld [vmem:[%s0 + $0x260] sm:$0xff]
  %v91 = vld [vmem:[%s0 + $0x268] sm:$0xff]
  %v92 = vld [vmem:[%s0 + $0x270] sm:$0xff]
  %v93 = vld [vmem:[%s0 + $0x278] sm:$0xff]
  %v94 = vld [vmem:[%s0 + $0x280] sm:$0xff]
  %v95 = vld [vmem:[%s0 + $0x288] sm:$0xff]
  %v96 = vld [vmem:[%s0 + $0x290] sm:$0xff]
  %v97 = vld [vmem:[%s0 + $0x298] sm:$0xff]
  %v98 = vld [vmem:[%s0 + $0x2a0] sm:$0xff]
  %v99 = vld [vmem:[%s0 + $0x2a8] sm:$0xff]
  %v100 = vld [vmem:[%s0 + $0x2b0] sm:$0xff]
  %v101 = vld [vmem:[%s0 + $0x2b8] sm:$0xff]
  %v102 = vld [vmem:[%s0 + $0x2c0] sm:$0xff]
  %v103 = vld [vmem:[%s0 + $0x2c8] sm:$0xff]
  %v104 = vld [vmem:[%s0 + $0x2d0] sm:$0xff]
  %v105 = vld [vmem:[%s0 + $0x2d8] sm:$0xff]
  %v106 = vld [vmem:[%s0 + $0x2e0] sm:$0xff]
  %v107 = vld [vmem:[%s0 + $0x2e8] sm:$0xff]
  %v108 = vld [vmem:[%s0 + $0x2f0] sm:$0xff]
  %v109 = vld [vmem:[%s0 + $0x2f8] sm:$0xff]
  %v110 = vld [vmem:[%s0 + $0x300] sm:$0xff]
  %v111 = vld [vmem:[%s0 + $0x308] sm:$0xff]
  %v112 = vld [vmem:[%s0 + $0x310] sm:$0xff]
  %v113 = vld [vmem:[%s0 + $0x318] sm:$0xff]
  %v114 = vld [vmem:[%s0 + $0x320] sm:$0xff]
  %v115 = vld [vmem:[%s0 + $0x328] sm:$0xff]
  %v116 = vld [vmem:[%s0 + $0x330] sm:$0xff]
  %v117 = vld [vmem:[%s0 + $0x338] sm:$0xff]
  %v118 = vld [vmem:[%s0 + $0x340] sm:$0xff]
  %v119 = vld [vmem:[%s0 + $0x348] sm:$0xff]
  %v120 = vld [vmem:[%s0 + $0x350] sm:$0xff]
  %v121 = vld [vmem:[%s0 + $0x358] sm:$0xff]
  %v122 = vld [vmem:[%s0 + $0x360] sm:$0xff]
  %v123 = vld [vmem:[%s0 + $0x368] sm:$0xff]
  %v124 = vld [vmem:[%s0 + $0x370] sm:$0xff]
  %v125 = vld [vmem:[%s0 + $0x378] sm:$0xff]
  %v126 = vld [vmem:[%s0 + $0x380] sm:$0xff]
  %v127 = vld [vmem:[%s0 + $0x388] sm:$0xff]
  %v128 = vld [vmem:[%s0 + $0x390] sm:$0xff]
  %v129 = vld [vmem:[%s0 + $0x398] sm:$0xff]
  %v130 = vld [vmem:[%s0 + $0x3a0] sm:$0xff]
  %v131 = vld [vmem:[%s0 + $0x3a8] sm:$0xff]
  %v132 = vld [vmem:[%s0 + $0x3b0] sm:$0xff]
  %v133 = vld [vmem:[%s0 + $0x3b8] sm:$0xff]
  %v134 = vld [vmem:[%s0 + $0x3c0] sm:$0xff]
  %v135 = vld [vmem:[%s0 + $0x3c8] sm:$0xff]
  %v136 = vld [vmem:[%s0 + $0x3d0] sm:$0xff]
  %v137 = vld [vmem:[%s0 + $0x3d8] sm:$0xff]
  %v138 = vld [vmem:[%s0 + $0x3e0] sm:$0xff]
  %v139 = vld [vmem:[%s0 + $0x3e8] sm:$0xff]
  %v140 = vld [vmem:[%s0 + $0x3f0] sm:$0xff]
  %v141 = vld [vmem:[%s0 + $0x3f8] sm:$0xff]
  %v142 = vld [vmem:[%s0 + $0x400] sm:$0xff]
  %v143 = vld [vmem:[%s0 + $0x408] sm:$0xff]
  %v144 = vld [vmem:[%s0 + $0x410] sm:$0xff]
  %v145 = vld [vmem:[%s0 + $0x418] sm:$0xff]
  %v146 = vld [vmem:[%s0 + $0x420] sm:$0xff]
  %v147 = vld [vmem:[%s0 + $0x428] sm:$0xff]
  %v148 = vld [vmem:[%s0 + $0x430] sm:$0xff]
  %v149 = vld [vmem:[%s0 + $0x438] sm:$0xff]
  %v150 = vld [vmem:[%s0 + $0x440] sm:$0xff]
  %v151 = vld [vmem:[%s0 + $0x448] sm:$0xff]
  %v152 = vld [vmem:[%s0 + $0x450] sm:$0xff]
  %v153 = vld [vmem:[%s0 + $0x458] sm:$0xff]
  %v154 = vld [vmem:[%s0 + $0x460] sm:$0xff]
  %v155 = vld [vmem:[%s0 + $0x468] sm:$0xff]
  %v156 = vld [vmem:[%s0 + $0x470] sm:$0xff]
  %v157 = vld [vmem:[%s0 + $0x478] sm:$0xff]
  %v158 = vld [vmem:[%s0 + $0x480] sm:$0xff]
  %v159 = vld [vmem:[%s0 + $0x488] sm:$0xff]
  %v160 = vld [vmem:[%s0 + $0x490] sm:$0xff]
  %v161 = vld [vmem:[%s0 + $0x498] sm:$0xff]
  %v162 = vld [vmem:[%s0 + $0x4a0] sm:$0xff]
  %v163 = vld [vmem:[%s0 + $0x4a8] sm:$0xff]
  %v164 = vld [vmem:[%s0 + $0x4b0] sm:$0xff]
  %v165 = vld [vmem:[%s0 + $0x4b8] sm:$0xff]
  %v166 = vld [vmem:[%s0 + $0x4c0] sm:$0xff]
  %v167 = vld [vmem:[%s0 + $0x4c8] sm:$0xff]
  %v168 = vld [vmem:[%s0 + $0x4d0] sm:$0xff]
  %v169 = vld [vmem:[%s0 + $0x4d8] sm:$0xff]
  %v170 = vld [vmem:[%s0 + $0x4e0] sm:$0xff]
  %v171 = vld [vmem:[%s0 + $0x4e8] sm:$0xff]
  %v172 = vld [vmem:[%s0 + $0x4f0] sm:$0xff]
  %v173 = vld [vmem:[%s0 + $0x4f8] sm:$0xff]
  %v174 = vld [vmem:[%s0 + $0x500] sm:$0xff]
  %v175 = vld [vmem:[%s0 + $0x508] sm:$0xff]
  %v176 = vld [vmem:[%s0 + $0x510] sm:$0xff]
  %v177 = vld [vmem:[%s0 + $0x518] sm:$0xff]
  %v178 = vld [vmem:[%s0 + $0x520] sm:$0xff]
  %v179 = vld [vmem:[%s0 + $0x528] sm:$0xff]
  %v180 = vld [vmem:[%s0 + $0x530] sm:$0xff]
  %v181 = vld [vmem:[%s0 + $0x538] sm:$0xff]
  %v182 = vld [vmem:[%s0 + $0x540] sm:$0xff]
  %v183 = vld [vmem:[%s0 + $0x548] sm:$0xff]
  %v184 = vld [vmem:[%s0 + $0x550] sm:$0xff]
  %v185 = vld [vmem:[%s0 + $0x558] sm:$0xff]
  %v186 = vld [vmem:[%s0 + $0x560] sm:$0xff]
  %v187 = vld [vmem:[%s0 + $0x568] sm:$0xff]
  %v188 = vld [vmem:[%s0 + $0x570] sm:$0xff]
  %v189 = vld [vmem:[%s0 + $0x578] sm:$0xff]
  %v190 = vld [vmem:[%s0 + $0x580] sm:$0xff]
  %v191 = vld [vmem:[%s0 + $0x588] sm:$0xff]
  %v192 = vld [vmem:[%s0 + $0x590] sm:$0xff]
  %v193 = vld [vmem:[%s0 + $0x598] sm:$0xff]
  %v194 = vld [vmem:[%s0 + $0x5a0] sm:$0xff]
  %v195 = vld [vmem:[%s0 + $0x5a8] sm:$0xff]
  %v196 = vld [vmem:[%s0 + $0x5b0] sm:$0xff]
  %v197 = vld [vmem:[%s0 + $0x5b8] sm:$0xff]
  %v198 = vld [vmem:[%s0 + $0x5c0] sm:$0xff]
  %v199 = vld [vmem:[%s0 + $0x5c8] sm:$0xff]
  %v200 = vld [vmem:[%s0 + $0x5d0] sm:$0xff]
  %v201 = vld [vmem:[%s0 + $0x5d8] sm:$0xff]
  %v202 = vld [vmem:[%s0 + $0x5e0] sm:$0xff]
  %v203 = vld [vmem:[%s0 + $0x5e8] sm:$0xff]
  %v204 = vld [vmem:[%s0 + $0x5f0] sm:$0xff]
  %v205 = vld [vmem:[%s0 + $0x5f8] sm:$0xff]
  %v206 = vld [vmem:[%s1] sm:$0xff]
  %v207 = vld [vmem:[%s1 + $0x8] sm:$0xff]
  %v208 = vld [vmem:[%s1 + $0x10] sm:$0xff]
  %v209 = vld [vmem:[%s1 + $0x18] sm:$0xff]
  %v210 = vld [vmem:[%s1 + $0x20] sm:$0xff]
  %v211 = vld [vmem:[%s1 + $0x28] sm:$0xff]
  %v212 = vld [vmem:[%s1 + $0x30] sm:$0xff]
  %v213 = vld [vmem:[%s1 + $0x38] sm:$0xff]
  %v214 = vld [vmem:[%s1 + $0x40] sm:$0xff]
  %v215 = vld [vmem:[%s1 + $0x48] sm:$0xff]
  %v216 = vld [vmem:[%s1 + $0x50] sm:$0xff]
  %v217 = vld [vmem:[%s1 + $0x58] sm:$0xff]
  %v218 = vld [vmem:[%s1 + $0x60] sm:$0xff]
  %v219 = vld [vmem:[%s1 + $0x68] sm:$0xff]
  %v220 = vld [vmem:[%s1 + $0x70] sm:$0xff]
  %v221 = vld [vmem:[%s1 + $0x78] sm:$0xff]
  %222 = vmatprep.subr.mxu0 0.0
  %223 = vmatpush1.msra.mxu0 %v206
  %224 = vmatprep.subr.mxu0 0.0
  %225 = vmatpush1.msra.mxu0 %v207
  %226 = vmatprep.subr.mxu0 0.0
  %227 = vmatpush1.msra.mxu0 %v208
  %228 = vmatprep.subr.mxu0 0.0
  %229 = vmatpush1.msra.mxu0 %v209
  %230 = vmatprep.subr.mxu0 0.0
  %231 = vmatpush1.msra.mxu0 %v210
  %232 = vmatprep.subr.mxu0 0.0
  %233 = vmatpush1.msra.mxu0 %v211
  %234 = vmatprep.subr.mxu0 0.0
  %235 = vmatpush1.msra.mxu0 %v212
  %236 = vmatprep.subr.mxu0 0.0
  %237 = vmatpush1.msra.mxu0 %v213
  %238 = vmatprep.subr.mxu0 0.0
  %239 = vmatpush1.msra.mxu0 %v214
  %240 = vmatprep.subr.mxu0 0.0
  %241 = vmatpush1.msra.mxu0 %v215
  %242 = vmatprep.subr.mxu0 0.0
  %243 = vmatpush1.msra.mxu0 %v216
  %244 = vmatprep.subr.mxu0 0.0
  %245 = vmatpush1.msra.mxu0 %v217
  %246 = vmatprep.subr.mxu0 0.0
  %247 = vmatpush1.msra.mxu0 %v218
  %248 = vmatprep.subr.mxu0 0.0
  %249 = vmatpush1.msra.mxu0 %v219
  %250 = vmatprep.subr.mxu0 0.0
  %251 = vmatpush1.msra.mxu0 %v220
  %252 = vmatprep.subr.mxu0 0.0
  %253 = vmatpush1.msra.mxu0 %v221
  %254 = vmatprep.subr.mxu0 0.0
  %255 = vmatpush1.msra.mxu0 0.0
  %256 = vmatprep.subr.mxu0 0.0
  %257 = vmatpush1.msra.mxu0 0.0
  %258 = vmatprep.subr.mxu0 0.0
  %259 = vmatpush1.msra.mxu0 0.0
  %260 = vmatprep.subr.mxu0 0.0
  %261 = vmatpush1.msra.mxu0 0.0
  %262 = vmatprep.subr.mxu0 0.0
  %263 = vmatpush1.msra.mxu0 0.0
  %264 = vmatprep.subr.mxu0 0.0
  %265 = vmatpush1.msra.mxu0 0.0
  %266 = vmatprep.subr.mxu0 0.0
  %267 = vmatpush1.msra.mxu0 0.0
  %268 = vmatprep.subr.mxu0 0.0
  %269 = vmatpush1.msra.mxu0 0.0
  %270 = vmatprep.subr.mxu0 0.0
  %271 = vmatpush1.msra.mxu0 0.0
  %272 = vmatprep.subr.mxu0 0.0
  %273 = vmatpush1.msra.mxu0 0.0
  %274 = vmatprep.subr.mxu0 0.0
  %275 = vmatpush1.msra.mxu0 0.0
  %276 = vmatprep.subr.mxu0 0.0
  %277 = vmatpush1.msra.mxu0 0.0
  %278 = vmatprep.subr.mxu0 0.0
  %279 = vmatpush1.msra.mxu0 0.0
  %280 = vmatprep.subr.mxu0 0.0
  %281 = vmatpush1.msra.mxu0 0.0
  %282 = vmatprep.subr.mxu0 0.0
  %283 = vmatpush1.msra.mxu0 0.0
  %284 = vmatprep.subr.mxu0 0.0
  %285 = vmatpush1.msra.mxu0 0.0
  %286 = vmatprep.mubr.f32.mxu0 0.0
  %287 = vmatmul.mubr.f32.gmra.mrb[0].mxu0 %v14
  %v288 = vpop.f32.mrb[0].mxu0
  %v289 = vadd.f32 0.0, %v288
  %v290 = vpop.f32.mrb[0].mxu0
  %291 = vmatprep.mubr.f32.mxu0 0.0
  %292 = vmatmul.mubr.f32.gmra.mrb[0].mxu0 %v15
  %v293 = vpop.f32.mrb[0].mxu0
  %v294 = vadd.f32 0.0, %v293
  %v295 = vpop.f32.mrb[0].mxu0
  %296 = vmatprep.mubr.f32.mxu0 0.0
  %297 = vmatmul.mubr.f32.gmra.mrb[0].mxu0 %v16
  %v298 = vpop.f32.mrb[0].mxu0
  %v299 = vadd.f32 0.0, %v298
  %v300 = vpop.f32.mrb[0].mxu0
  %301 = vmatprep.mubr.f32.mxu0 0.0
  %302 = vmatmul.mubr.f32.gmra.mrb[0].mxu0 %v17
  %v303 = vpop.f32.mrb[0].mxu0
  %v304 = vadd.f32 0.0, %v303
  %v305 = vpop.f32.mrb[0].mxu0
  %306 = vmatprep.mubr.f32.mxu0 0.0
  %307 = vmatmul.mubr.f32.gmra.mrb[0].mxu0 %v18
  %v308 = vpop.f32.mrb[0].mxu0
  %v309 = vadd.f32 0.0, %v308
  %v310 = vpop.f32.mrb[0].mxu0
  %311 = vmatprep.mubr.f32.mxu0 0.0
  %312 = vmatmul.mubr.f32.gmra.mrb[0].mxu0 %v19
  %v313 = vpop.f32.mrb[0].mxu0
  %v314 = vadd.f32 0.0, %v313
  %v315 = vpop.f32.mrb[0].mxu0
  %316 = vmatprep.mubr.f32.mxu0 0.0
  %317 = vmatmul.mubr.f32.gmra.mrb[0].mxu0 %v20
  %v318 = vpop.f32.mrb[0].mxu0
  %v319 = vadd.f32 0.0, %v318
  %v320 = vpop.f32.mrb[0].mxu0
  %321 = vmatprep.mubr.f32.mxu0 0.0
  %322 = vmatmul.mubr.f32.gmra.mrb[0].mxu0 %v21
  %v323 = vpop.f32.mrb[0].mxu0
  %v324 = vadd.f32 0.0, %v323
  %v325 = vpop.f32.mrb[0].mxu0
  %326 = vmatprep.mubr.f32.mxu0 0.0
  %327 = vmatmul.mubr.f32.gmra.mrb[0].mxu0 %v22
  %v328 = vpop.f32.mrb[0].mxu0
  %v329 = vadd.f32 0.0, %v328
  %v330 = vpop.f32.mrb[0].mxu0
  %331 = vmatprep.mubr.f32.mxu0 0.0
  %332 = vmatmul.mubr.f32.gmra.mrb[0].mxu0 %v23
  %v333 = vpop.f32.mrb[0].mxu0
  %v334 = vadd.f32 0.0, %v333
  %v335 = vpop.f32.mrb[0].mxu0
  %336 = vmatprep.mubr.f32.mxu0 0.0
  %337 = vmatmul.mubr.f32.gmra.mrb[0].mxu0 %v24
  %v338 = vpop.f32.mrb[0].mxu0
  %v339 = vadd.f32 0.0, %v338
  %v340 = vpop.f32.mrb[0].mxu0
  %341 = vmatprep.mubr.f32.mxu0 0.0
  %342 = vmatmul.mubr.f32.gmra.mrb[0].mxu0 %v25
  %v343 = vpop.f32.mrb[0].mxu0
  %v344 = vadd.f32 0.0, %v343
  %v345 = vpop.f32.mrb[0].mxu0
  %346 = vmatprep.mubr.f32.mxu0 0.0
  %347 = vmatmul.mubr.f32.gmra.mrb[0].mxu0 %v26
  %v348 = vpop.f32.mrb[0].mxu0
  %v349 = vadd.f32 0.0, %v348
  %v350 = vpop.f32.mrb[0].mxu0
  %351 = vmatprep.mubr.f32.mxu0 0.0
  %352 = vmatmul.mubr.f32.gmra.mrb[0].mxu0 %v27
  %v353 = vpop.f32.mrb[0].mxu0
  %v354 = vadd.f32 0.0, %v353
  %v355 = vpop.f32.mrb[0].mxu0
  %356 = vmatprep.mubr.f32.mxu0 0.0
  %357 = vmatmul.mubr.f32.gmra.mrb[0].mxu0 %v28
  %v358 = vpop.f32.mrb[0].mxu0
  %v359 = vadd.f32 0.0, %v358
  %v360 = vpop.f32.mrb[0].mxu0
  %361 = vmatprep.mubr.f32.mxu0 0.0
  %362 = vmatmul.mubr.f32.gmra.mrb[0].mxu0 %v29
  %v363 = vpop.f32.mrb[0].mxu0
  %v364 = vadd.f32 0.0, %v363
  %v365 = vpop.f32.mrb[0].mxu0
  %366 = vmatprep.mubr.f32.mxu0 0.0
  %367 = vmatmul.mubr.f32.gmra.mrb[0].mxu0 %v30
  %v368 = vpop.f32.mrb[0].mxu0
  %v369 = vadd.f32 0.0, %v368
  %v370 = vpop.f32.mrb[0].mxu0
  %371 = vmatprep.mubr.f32.mxu0 0.0
  %372 = vmatmul.mubr.f32.gmra.mrb[0].mxu0 %v31
  %v373 = vpop.f32.mrb[0].mxu0
  %v374 = vadd.f32 0.0, %v373
  %v375 = vpop.f32.mrb[0].mxu0
  %376 = vmatprep.mubr.f32.mxu0 0.0
  %377 = vmatmul.mubr.f32.gmra.mrb[0].mxu0 %v32
  %v378 = vpop.f32.mrb[0].mxu0
  %v379 = vadd.f32 0.0, %v378
  %v380 = vpop.f32.mrb[0].mxu0
  %381 = vmatprep.mubr.f32.mxu0 0.0
  %382 = vmatmul.mubr.f32.gmra.mrb[0].mxu0 %v33
  %v383 = vpop.f32.mrb[0].mxu0
  %v384 = vadd.f32 0.0, %v383
  %v385 = vpop.f32.mrb[0].mxu0
  %386 = vmatprep.mubr.f32.mxu0 0.0
  %387 = vmatmul.mubr.f32.gmra.mrb[0].mxu0 %v34
  %v388 = vpop.f32.mrb[0].mxu0
  %v389 = vadd.f32 0.0, %v388
  %v390 = vpop.f32.mrb[0].mxu0
  %391 = vmatprep.mubr.f32.mxu0 0.0
  %392 = vmatmul.mubr.f32.gmra.mrb[0].mxu0 %v35
  %v393 = vpop.f32.mrb[0].mxu0
  %v394 = vadd.f32 0.0, %v393
  %v395 = vpop.f32.mrb[0].mxu0
  %396 = vmatprep.mubr.f32.mxu0 0.0
  %397 = vmatmul.mubr.f32.gmra.mrb[0].mxu0 %v36
  %v398 = vpop.f32.mrb[0].mxu0
  %v399 = vadd.f32 0.0, %v398
  %v400 = vpop.f32.mrb[0].mxu0
  %401 = vmatprep.mubr.f32.mxu0 0.0
  %402 = vmatmul.mubr.f32.gmra.mrb[0].mxu0 %v37
  %v403 = vpop.f32.mrb[0].mxu0
  %v404 = vadd.f32 0.0, %v403
  %v405 = vpop.f32.mrb[0].mxu0
  %406 = vmatprep.mubr.f32.mxu0 0.0
  %407 = vmatmul.mubr.f32.gmra.mrb[0].mxu0 %v38
  %v408 = vpop.f32.mrb[0].mxu0
  %v409 = vadd.f32 0.0, %v408
  %v410 = vpop.f32.mrb[0].mxu0
  %411 = vmatprep.mubr.f32.mxu0 0.0
  %412 = vmatmul.mubr.f32.gmra.mrb[0].mxu0 %v39
  %v413 = vpop.f32.mrb[0].mxu0
  %v414 = vadd.f32 0.0, %v413
  %v415 = vpop.f32.mrb[0].mxu0
  %416 = vmatprep.mubr.f32.mxu0 0.0
  %417 = vmatmul.mubr.f32.gmra.mrb[0].mxu0 %v40
  %v418 = vpop.f32.mrb[0].mxu0
  %v419 = vadd.f32 0.0, %v418
  %v420 = vpop.f32.mrb[0].mxu0
  %421 = vmatprep.mubr.f32.mxu0 0.0
  %422 = vmatmul.mubr.f32.gmra.mrb[0].mxu0 %v41
  %v423 = vpop.f32.mrb[0].mxu0
  %v424 = vadd.f32 0.0, %v423
  %v425 = vpop.f32.mrb[0].mxu0
  %426 = vmatprep.mubr.f32.mxu0 0.0
  %427 = vmatmul.mubr.f32.gmra.mrb[0].mxu0 %v42
  %v428 = vpop.f32.mrb[0].mxu0
  %v429 = vadd.f32 0.0, %v428
  %v430 = vpop.f32.mrb[0].mxu0
  %431 = vmatprep.mubr.f32.mxu0 0.0
  %432 = vmatmul.mubr.f32.gmra.mrb[0].mxu0 %v43
  %v433 = vpop.f32.mrb[0].mxu0
  %v434 = vadd.f32 0.0, %v433
  %v435 = vpop.f32.mrb[0].mxu0
  %436 = vmatprep.mubr.f32.mxu0 0.0
  %437 = vmatmul.mubr.f32.gmra.mrb[0].mxu0 %v44
  %v438 = vpop.f32.mrb[0].mxu0
  %v439 = vadd.f32 0.0, %v438
  %v440 = vpop.f32.mrb[0].mxu0
  %441 = vmatprep.mubr.f32.mxu0 0.0
  %442 = vmatmul.mubr.f32.gmra.mrb[0].mxu0 %v45
  %v443 = vpop.f32.mrb[0].mxu0
  %v444 = vadd.f32 0.0, %v443
  %v445 = vpop.f32.mrb[0].mxu0
  %446 = vmatprep.mubr.f32.mxu0 0.0
  %447 = vmatmul.mubr.f32.gmra.mrb[0].mxu0 %v46
  %v448 = vpop.f32.mrb[0].mxu0
  %v449 = vadd.f32 0.0, %v448
  %v450 = vpop.f32.mrb[0].mxu0
  %451 = vmatprep.mubr.f32.mxu0 0.0
  %452 = vmatmul.mubr.f32.gmra.mrb[0].mxu0 %v47
  %v453 = vpop.f32.mrb[0].mxu0
  %v454 = vadd.f32 0.0, %v453
  %v455 = vpop.f32.mrb[0].mxu0
  %456 = vmatprep.mubr.f32.mxu0 0.0
  %457 = vmatmul.mubr.f32.gmra.mrb[0].mxu0 %v48
  %v458 = vpop.f32.mrb[0].mxu0
  %v459 = vadd.f32 0.0, %v458
  %v460 = vpop.f32.mrb[0].mxu0
  %461 = vmatprep.mubr.f32.mxu0 0.0
  %462 = vmatmul.mubr.f32.gmra.mrb[0].mxu0 %v49
  %v463 = vpop.f32.mrb[0].mxu0
  %v464 = vadd.f32 0.0, %v463
  %v465 = vpop.f32.mrb[0].mxu0
  %466 = vmatprep.mubr.f32.mxu0 0.0
  %467 = vmatmul.mubr.f32.gmra.mrb[0].mxu0 %v50
  %v468 = vpop.f32.mrb[0].mxu0
  %v469 = vadd.f32 0.0, %v468
  %v470 = vpop.f32.mrb[0].mxu0
  %471 = vmatprep.mubr.f32.mxu0 0.0
  %472 = vmatmul.mubr.f32.gmra.mrb[0].mxu0 %v51
  %v473 = vpop.f32.mrb[0].mxu0
  %v474 = vadd.f32 0.0, %v473
  %v475 = vpop.f32.mrb[0].mxu0
  %476 = vmatprep.mubr.f32.mxu0 0.0
  %477 = vmatmul.mubr.f32.gmra.mrb[0].mxu0 %v52
  %v478 = vpop.f32.mrb[0].mxu0
  %v479 = vadd.f32 0.0, %v478
  %v480 = vpop.f32.mrb[0].mxu0
  %481 = vmatprep.mubr.f32.mxu0 0.0
  %482 = vmatmul.mubr.f32.gmra.mrb[0].mxu0 %v53
  %v483 = vpop.f32.mrb[0].mxu0
  %v484 = vadd.f32 0.0, %v483
  %v485 = vpop.f32.mrb[0].mxu0
  %486 = vmatprep.mubr.f32.mxu0 0.0
  %487 = vmatmul.mubr.f32.gmra.mrb[0].mxu0 %v54
  %v488 = vpop.f32.mrb[0].mxu0
  %v489 = vadd.f32 0.0, %v488
  %v490 = vpop.f32.mrb[0].mxu0
  %491 = vmatprep.mubr.f32.mxu0 0.0
  %492 = vmatmul.mubr.f32.gmra.mrb[0].mxu0 %v55
  %v493 = vpop.f32.mrb[0].mxu0
  %v494 = vadd.f32 0.0, %v493
  %v495 = vpop.f32.mrb[0].mxu0
  %496 = vmatprep.mubr.f32.mxu0 0.0
  %497 = vmatmul.mubr.f32.gmra.mrb[0].mxu0 %v56
  %v498 = vpop.f32.mrb[0].mxu0
  %v499 = vadd.f32 0.0, %v498
  %v500 = vpop.f32.mrb[0].mxu0
  %501 = vmatprep.mubr.f32.mxu0 0.0
  %502 = vmatmul.mubr.f32.gmra.mrb[0].mxu0 %v57
  %v503 = vpop.f32.mrb[0].mxu0
  %v504 = vadd.f32 0.0, %v503
  %v505 = vpop.f32.mrb[0].mxu0
  %506 = vmatprep.mubr.f32.mxu0 0.0
  %507 = vmatmul.mubr.f32.gmra.mrb[0].mxu0 %v58
  %v508 = vpop.f32.mrb[0].mxu0
  %v509 = vadd.f32 0.0, %v508
  %v510 = vpop.f32.mrb[0].mxu0
  %511 = vmatprep.mubr.f32.mxu0 0.0
  %512 = vmatmul.mubr.f32.gmra.mrb[0].mxu0 %v59
  %v513 = vpop.f32.mrb[0].mxu0
  %v514 = vadd.f32 0.0, %v513
  %v515 = vpop.f32.mrb[0].mxu0
  %516 = vmatprep.mubr.f32.mxu0 0.0
  %517 = vmatmul.mubr.f32.gmra.mrb[0].mxu0 %v60
  %v518 = vpop.f32.mrb[0].mxu0
  %v519 = vadd.f32 0.0, %v518
  %v520 = vpop.f32.mrb[0].mxu0
  %521 = vmatprep.mubr.f32.mxu0 0.0
  %522 = vmatmul.mubr.f32.gmra.mrb[0].mxu0 %v61
  %v523 = vpop.f32.mrb[0].mxu0
  %v524 = vadd.f32 0.0, %v523
  %v525 = vpop.f32.mrb[0].mxu0
  %526 = vmatprep.mubr.f32.mxu0 0.0
  %527 = vmatmul.mubr.f32.gmra.mrb[0].mxu0 %v62
  %v528 = vpop.f32.mrb[0].mxu0
  %v529 = vadd.f32 0.0, %v528
  %v530 = vpop.f32.mrb[0].mxu0
  %531 = vmatprep.mubr.f32.mxu0 0.0
  %532 = vmatmul.mubr.f32.gmra.mrb[0].mxu0 %v63
  %v533 = vpop.f32.mrb[0].mxu0
  %v534 = vadd.f32 0.0, %v533
  %v535 = vpop.f32.mrb[0].mxu0
  %536 = vmatprep.mubr.f32.mxu0 0.0
  %537 = vmatmul.mubr.f32.gmra.mrb[0].mxu0 %v64
  %v538 = vpop.f32.mrb[0].mxu0
  %v539 = vadd.f32 0.0, %v538
  %v540 = vpop.f32.mrb[0].mxu0
  %541 = vmatprep.mubr.f32.mxu0 0.0
  %542 = vmatmul.mubr.f32.gmra.mrb[0].mxu0 %v65
  %v543 = vpop.f32.mrb[0].mxu0
  %v544 = vadd.f32 0.0, %v543
  %v545 = vpop.f32.mrb[0].mxu0
  %546 = vmatprep.mubr.f32.mxu0 0.0
  %547 = vmatmul.mubr.f32.gmra.mrb[0].mxu0 %v66
  %v548 = vpop.f32.mrb[0].mxu0
  %v549 = vadd.f32 0.0, %v548
  %v550 = vpop.f32.mrb[0].mxu0
  %551 = vmatprep.mubr.f32.mxu0 0.0
  %552 = vmatmul.mubr.f32.gmra.mrb[0].mxu0 %v67
  %v553 = vpop.f32.mrb[0].mxu0
  %v554 = vadd.f32 0.0, %v553
  %v555 = vpop.f32.mrb[0].mxu0
  %556 = vmatprep.mubr.f32.mxu0 0.0
  %557 = vmatmul.mubr.f32.gmra.mrb[0].mxu0 %v68
  %v558 = vpop.f32.mrb[0].mxu0
  %v559 = vadd.f32 0.0, %v558
  %v560 = vpop.f32.mrb[0].mxu0
  %561 = vmatprep.mubr.f32.mxu0 0.0
  %562 = vmatmul.mubr.f32.gmra.mrb[0].mxu0 %v69
  %v563 = vpop.f32.mrb[0].mxu0
  %v564 = vadd.f32 0.0, %v563
  %v565 = vpop.f32.mrb[0].mxu0
  %566 = vmatprep.mubr.f32.mxu0 0.0
  %567 = vmatmul.mubr.f32.gmra.mrb[0].mxu0 %v70
  %v568 = vpop.f32.mrb[0].mxu0
  %v569 = vadd.f32 0.0, %v568
  %v570 = vpop.f32.mrb[0].mxu0
  %571 = vmatprep.mubr.f32.mxu0 0.0
  %572 = vmatmul.mubr.f32.gmra.mrb[0].mxu0 %v71
  %v573 = vpop.f32.mrb[0].mxu0
  %v574 = vadd.f32 0.0, %v573
  %v575 = vpop.f32.mrb[0].mxu0
  %576 = vmatprep.mubr.f32.mxu0 0.0
  %577 = vmatmul.mubr.f32.gmra.mrb[0].mxu0 %v72
  %v578 = vpop.f32.mrb[0].mxu0
  %v579 = vadd.f32 0.0, %v578
  %v580 = vpop.f32.mrb[0].mxu0
  %581 = vmatprep.mubr.f32.mxu0 0.0
  %582 = vmatmul.mubr.f32.gmra.mrb[0].mxu0 %v73
  %v583 = vpop.f32.mrb[0].mxu0
  %v584 = vadd.f32 0.0, %v583
  %v585 = vpop.f32.mrb[0].mxu0
  %586 = vmatprep.mubr.f32.mxu0 0.0
  %587 = vmatmul.mubr.f32.gmra.mrb[0].mxu0 %v74
  %v588 = vpop.f32.mrb[0].mxu0
  %v589 = vadd.f32 0.0, %v588
  %v590 = vpop.f32.mrb[0].mxu0
  %591 = vmatprep.mubr.f32.mxu0 0.0
  %592 = vmatmul.mubr.f32.gmra.mrb[0].mxu0 %v75
  %v593 = vpop.f32.mrb[0].mxu0
  %v594 = vadd.f32 0.0, %v593
  %v595 = vpop.f32.mrb[0].mxu0
  %596 = vmatprep.mubr.f32.mxu0 0.0
  %597 = vmatmul.mubr.f32.gmra.mrb[0].mxu0 %v76
  %v598 = vpop.f32.mrb[0].mxu0
  %v599 = vadd.f32 0.0, %v598
  %v600 = vpop.f32.mrb[0].mxu0
  %601 = vmatprep.mubr.f32.mxu0 0.0
  %602 = vmatmul.mubr.f32.gmra.mrb[0].mxu0 %v77
  %v603 = vpop.f32.mrb[0].mxu0
  %v604 = vadd.f32 0.0, %v603
  %v605 = vpop.f32.mrb[0].mxu0
  %606 = vmatprep.mubr.f32.mxu0 0.0
  %607 = vmatmul.mubr.f32.gmra.mrb[0].mxu0 %v78
  %v608 = vpop.f32.mrb[0].mxu0
  %v609 = vadd.f32 0.0, %v608
  %v610 = vpop.f32.mrb[0].mxu0
  %611 = vmatprep.mubr.f32.mxu0 0.0
  %612 = vmatmul.mubr.f32.gmra.mrb[0].mxu0 %v79
  %v613 = vpop.f32.mrb[0].mxu0
  %v614 = vadd.f32 0.0, %v613
  %v615 = vpop.f32.mrb[0].mxu0
  %616 = vmatprep.mubr.f32.mxu0 0.0
  %617 = vmatmul.mubr.f32.gmra.mrb[0].mxu0 %v80
  %v618 = vpop.f32.mrb[0].mxu0
  %v619 = vadd.f32 0.0, %v618
  %v620 = vpop.f32.mrb[0].mxu0
  %621 = vmatprep.mubr.f32.mxu0 0.0
  %622 = vmatmul.mubr.f32.gmra.mrb[0].mxu0 %v81
  %v623 = vpop.f32.mrb[0].mxu0
  %v624 = vadd.f32 0.0, %v623
  %v625 = vpop.f32.mrb[0].mxu0
  %626 = vmatprep.mubr.f32.mxu0 0.0
  %627 = vmatmul.mubr.f32.gmra.mrb[0].mxu0 %v82
  %v628 = vpop.f32.mrb[0].mxu0
  %v629 = vadd.f32 0.0, %v628
  %v630 = vpop.f32.mrb[0].mxu0
  %631 = vmatprep.mubr.f32.mxu0 0.0
  %632 = vmatmul.mubr.f32.gmra.mrb[0].mxu0 %v83
  %v633 = vpop.f32.mrb[0].mxu0
  %v634 = vadd.f32 0.0, %v633
  %v635 = vpop.f32.mrb[0].mxu0
  %636 = vmatprep.mubr.f32.mxu0 0.0
  %637 = vmatmul.mubr.f32.gmra.mrb[0].mxu0 %v84
  %v638 = vpop.f32.mrb[0].mxu0
  %v639 = vadd.f32 0.0, %v638
  %v640 = vpop.f32.mrb[0].mxu0
  %641 = vmatprep.mubr.f32.mxu0 0.0
  %642 = vmatmul.mubr.f32.gmra.mrb[0].mxu0 %v85
  %v643 = vpop.f32.mrb[0].mxu0
  %v644 = vadd.f32 0.0, %v643
  %v645 = vpop.f32.mrb[0].mxu0
  %646 = vmatprep.mubr.f32.mxu0 0.0
  %647 = vmatmul.mubr.f32.gmra.mrb[0].mxu0 %v86
  %v648 = vpop.f32.mrb[0].mxu0
  %v649 = vadd.f32 0.0, %v648
  %v650 = vpop.f32.mrb[0].mxu0
  %651 = vmatprep.mubr.f32.mxu0 0.0
  %652 = vmatmul.mubr.f32.gmra.mrb[0].mxu0 %v87
  %v653 = vpop.f32.mrb[0].mxu0
  %v654 = vadd.f32 0.0, %v653
  %v655 = vpop.f32.mrb[0].mxu0
  %656 = vmatprep.mubr.f32.mxu0 0.0
  %657 = vmatmul.mubr.f32.gmra.mrb[0].mxu0 %v88
  %v658 = vpop.f32.mrb[0].mxu0
  %v659 = vadd.f32 0.0, %v658
  %v660 = vpop.f32.mrb[0].mxu0
  %661 = vmatprep.mubr.f32.mxu0 0.0
  %662 = vmatmul.mubr.f32.gmra.mrb[0].mxu0 %v89
  %v663 = vpop.f32.mrb[0].mxu0
  %v664 = vadd.f32 0.0, %v663
  %v665 = vpop.f32.mrb[0].mxu0
  %666 = vmatprep.mubr.f32.mxu0 0.0
  %667 = vmatmul.mubr.f32.gmra.mrb[0].mxu0 %v90
  %v668 = vpop.f32.mrb[0].mxu0
  %v669 = vadd.f32 0.0, %v668
  %v670 = vpop.f32.mrb[0].mxu0
  %671 = vmatprep.mubr.f32.mxu0 0.0
  %672 = vmatmul.mubr.f32.gmra.mrb[0].mxu0 %v91
  %v673 = vpop.f32.mrb[0].mxu0
  %v674 = vadd.f32 0.0, %v673
  %v675 = vpop.f32.mrb[0].mxu0
  %676 = vmatprep.mubr.f32.mxu0 0.0
  %677 = vmatmul.mubr.f32.gmra.mrb[0].mxu0 %v92
  %v678 = vpop.f32.mrb[0].mxu0
  %v679 = vadd.f32 0.0, %v678
  %v680 = vpop.f32.mrb[0].mxu0
  %681 = vmatprep.mubr.f32.mxu0 0.0
  %682 = vmatmul.mubr.f32.gmra.mrb[0].mxu0 %v93
  %v683 = vpop.f32.mrb[0].mxu0
  %v684 = vadd.f32 0.0, %v683
  %v685 = vpop.f32.mrb[0].mxu0
  %686 = vmatprep.mubr.f32.mxu0 0.0
  %687 = vmatmul.mubr.f32.gmra.mrb[0].mxu0 %v94
  %v688 = vpop.f32.mrb[0].mxu0
  %v689 = vadd.f32 0.0, %v688
  %v690 = vpop.f32.mrb[0].mxu0
  %691 = vmatprep.mubr.f32.mxu0 0.0
  %692 = vmatmul.mubr.f32.gmra.mrb[0].mxu0 %v95
  %v693 = vpop.f32.mrb[0].mxu0
  %v694 = vadd.f32 0.0, %v693
  %v695 = vpop.f32.mrb[0].mxu0
  %696 = vmatprep.mubr.f32.mxu0 0.0
  %697 = vmatmul.mubr.f32.gmra.mrb[0].mxu0 %v96
  %v698 = vpop.f32.mrb[0].mxu0
  %v699 = vadd.f32 0.0, %v698
  %v700 = vpop.f32.mrb[0].mxu0
  %701 = vmatprep.mubr.f32.mxu0 0.0
  %702 = vmatmul.mubr.f32.gmra.mrb[0].mxu0 %v97
  %v703 = vpop.f32.mrb[0].mxu0
  %v704 = vadd.f32 0.0, %v703
  %v705 = vpop.f32.mrb[0].mxu0
  %706 = vmatprep.mubr.f32.mxu0 0.0
  %707 = vmatmul.mubr.f32.gmra.mrb[0].mxu0 %v98
  %v708 = vpop.f32.mrb[0].mxu0
  %v709 = vadd.f32 0.0, %v708
  %v710 = vpop.f32.mrb[0].mxu0
  %711 = vmatprep.mubr.f32.mxu0 0.0
  %712 = vmatmul.mubr.f32.gmra.mrb[0].mxu0 %v99
  %v713 = vpop.f32.mrb[0].mxu0
  %v714 = vadd.f32 0.0, %v713
  %v715 = vpop.f32.mrb[0].mxu0
  %716 = vmatprep.mubr.f32.mxu0 0.0
  %717 = vmatmul.mubr.f32.gmra.mrb[0].mxu0 %v100
  %v718 = vpop.f32.mrb[0].mxu0
  %v719 = vadd.f32 0.0, %v718
  %v720 = vpop.f32.mrb[0].mxu0
  %721 = vmatprep.mubr.f32.mxu0 0.0
  %722 = vmatmul.mubr.f32.gmra.mrb[0].mxu0 %v101
  %v723 = vpop.f32.mrb[0].mxu0
  %v724 = vadd.f32 0.0, %v723
  %v725 = vpop.f32.mrb[0].mxu0
  %726 = vmatprep.mubr.f32.mxu0 0.0
  %727 = vmatmul.mubr.f32.gmra.mrb[0].mxu0 %v102
  %v728 = vpop.f32.mrb[0].mxu0
  %v729 = vadd.f32 0.0, %v728
  %v730 = vpop.f32.mrb[0].mxu0
  %731 = vmatprep.mubr.f32.mxu0 0.0
  %732 = vmatmul.mubr.f32.gmra.mrb[0].mxu0 %v103
  %v733 = vpop.f32.mrb[0].mxu0
  %v734 = vadd.f32 0.0, %v733
  %v735 = vpop.f32.mrb[0].mxu0
  %736 = vmatprep.mubr.f32.mxu0 0.0
  %737 = vmatmul.mubr.f32.gmra.mrb[0].mxu0 %v104
  %v738 = vpop.f32.mrb[0].mxu0
  %v739 = vadd.f32 0.0, %v738
  %v740 = vpop.f32.mrb[0].mxu0
  %741 = vmatprep.mubr.f32.mxu0 0.0
  %742 = vmatmul.mubr.f32.gmra.mrb[0].mxu0 %v105
  %v743 = vpop.f32.mrb[0].mxu0
  %v744 = vadd.f32 0.0, %v743
  %v745 = vpop.f32.mrb[0].mxu0
  %746 = vmatprep.mubr.f32.mxu0 0.0
  %747 = vmatmul.mubr.f32.gmra.mrb[0].mxu0 %v106
  %v748 = vpop.f32.mrb[0].mxu0
  %v749 = vadd.f32 0.0, %v748
  %v750 = vpop.f32.mrb[0].mxu0
  %751 = vmatprep.mubr.f32.mxu0 0.0
  %752 = vmatmul.mubr.f32.gmra.mrb[0].mxu0 %v107
  %v753 = vpop.f32.mrb[0].mxu0
  %v754 = vadd.f32 0.0, %v753
  %v755 = vpop.f32.mrb[0].mxu0
  %756 = vmatprep.mubr.f32.mxu0 0.0
  %757 = vmatmul.mubr.f32.gmra.mrb[0].mxu0 %v108
  %v758 = vpop.f32.mrb[0].mxu0
  %v759 = vadd.f32 0.0, %v758
  %v760 = vpop.f32.mrb[0].mxu0
  %761 = vmatprep.mubr.f32.mxu0 0.0
  %762 = vmatmul.mubr.f32.gmra.mrb[0].mxu0 %v109
  %v763 = vpop.f32.mrb[0].mxu0
  %v764 = vadd.f32 0.0, %v763
  %v765 = vpop.f32.mrb[0].mxu0
  %766 = vmatprep.mubr.f32.mxu0 0.0
  %767 = vmatmul.mubr.f32.gmra.mrb[0].mxu0 %v110
  %v768 = vpop.f32.mrb[0].mxu0
  %v769 = vadd.f32 0.0, %v768
  %v770 = vpop.f32.mrb[0].mxu0
  %771 = vmatprep.mubr.f32.mxu0 0.0
  %772 = vmatmul.mubr.f32.gmra.mrb[0].mxu0 %v111
  %v773 = vpop.f32.mrb[0].mxu0
  %v774 = vadd.f32 0.0, %v773
  %v775 = vpop.f32.mrb[0].mxu0
  %776 = vmatprep.mubr.f32.mxu0 0.0
  %777 = vmatmul.mubr.f32.gmra.mrb[0].mxu0 %v112
  %v778 = vpop.f32.mrb[0].mxu0
  %v779 = vadd.f32 0.0, %v778
  %v780 = vpop.f32.mrb[0].mxu0
  %781 = vmatprep.mubr.f32.mxu0 0.0
  %782 = vmatmul.mubr.f32.gmra.mrb[0].mxu0 %v113
  %v783 = vpop.f32.mrb[0].mxu0
  %v784 = vadd.f32 0.0, %v783
  %v785 = vpop.f32.mrb[0].mxu0
  %786 = vmatprep.mubr.f32.mxu0 0.0
  %787 = vmatmul.mubr.f32.gmra.mrb[0].mxu0 %v114
  %v788 = vpop.f32.mrb[0].mxu0
  %v789 = vadd.f32 0.0, %v788
  %v790 = vpop.f32.mrb[0].mxu0
  %791 = vmatprep.mubr.f32.mxu0 0.0
  %792 = vmatmul.mubr.f32.gmra.mrb[0].mxu0 %v115
  %v793 = vpop.f32.mrb[0].mxu0
  %v794 = vadd.f32 0.0, %v793
  %v795 = vpop.f32.mrb[0].mxu0
  %796 = vmatprep.mubr.f32.mxu0 0.0
  %797 = vmatmul.mubr.f32.gmra.mrb[0].mxu0 %v116
  %v798 = vpop.f32.mrb[0].mxu0
  %v799 = vadd.f32 0.0, %v798
  %v800 = vpop.f32.mrb[0].mxu0
  %801 = vmatprep.mubr.f32.mxu0 0.0
  %802 = vmatmul.mubr.f32.gmra.mrb[0].mxu0 %v117
  %v803 = vpop.f32.mrb[0].mxu0
  %v804 = vadd.f32 0.0, %v803
  %v805 = vpop.f32.mrb[0].mxu0
  %806 = vmatprep.mubr.f32.mxu0 0.0
  %807 = vmatmul.mubr.f32.gmra.mrb[0].mxu0 %v118
  %v808 = vpop.f32.mrb[0].mxu0
  %v809 = vadd.f32 0.0, %v808
  %v810 = vpop.f32.mrb[0].mxu0
  %811 = vmatprep.mubr.f32.mxu0 0.0
  %812 = vmatmul.mubr.f32.gmra.mrb[0].mxu0 %v119
  %v813 = vpop.f32.mrb[0].mxu0
  %v814 = vadd.f32 0.0, %v813
  %v815 = vpop.f32.mrb[0].mxu0
  %816 = vmatprep.mubr.f32.mxu0 0.0
  %817 = vmatmul.mubr.f32.gmra.mrb[0].mxu0 %v120
  %v818 = vpop.f32.mrb[0].mxu0
  %v819 = vadd.f32 0.0, %v818
  %v820 = vpop.f32.mrb[0].mxu0
  %821 = vmatprep.mubr.f32.mxu0 0.0
  %822 = vmatmul.mubr.f32.gmra.mrb[0].mxu0 %v121
  %v823 = vpop.f32.mrb[0].mxu0
  %v824 = vadd.f32 0.0, %v823
  %v825 = vpop.f32.mrb[0].mxu0
  %826 = vmatprep.mubr.f32.mxu0 0.0
  %827 = vmatmul.mubr.f32.gmra.mrb[0].mxu0 %v122
  %v828 = vpop.f32.mrb[0].mxu0
  %v829 = vadd.f32 0.0, %v828
  %v830 = vpop.f32.mrb[0].mxu0
  %831 = vmatprep.mubr.f32.mxu0 0.0
  %832 = vmatmul.mubr.f32.gmra.mrb[0].mxu0 %v123
  %v833 = vpop.f32.mrb[0].mxu0
  %v834 = vadd.f32 0.0, %v833
  %v835 = vpop.f32.mrb[0].mxu0
  %836 = vmatprep.mubr.f32.mxu0 0.0
  %837 = vmatmul.mubr.f32.gmra.mrb[0].mxu0 %v124
  %v838 = vpop.f32.mrb[0].mxu0
  %v839 = vadd.f32 0.0, %v838
  %v840 = vpop.f32.mrb[0].mxu0
  %841 = vmatprep.mubr.f32.mxu0 0.0
  %842 = vmatmul.mubr.f32.gmra.mrb[0].mxu0 %v125
  %v843 = vpop.f32.mrb[0].mxu0
  %v844 = vadd.f32 0.0, %v843
  %v845 = vpop.f32.mrb[0].mxu0
  %846 = vmatprep.mubr.f32.mxu0 0.0
  %847 = vmatmul.mubr.f32.gmra.mrb[0].mxu0 %v126
  %v848 = vpop.f32.mrb[0].mxu0
  %v849 = vadd.f32 0.0, %v848
  %v850 = vpop.f32.mrb[0].mxu0
  %851 = vmatprep.mubr.f32.mxu0 0.0
  %852 = vmatmul.mubr.f32.gmra.mrb[0].mxu0 %v127
  %v853 = vpop.f32.mrb[0].mxu0
  %v854 = vadd.f32 0.0, %v853
  %v855 = vpop.f32.mrb[0].mxu0
  %856 = vmatprep.mubr.f32.mxu0 0.0
  %857 = vmatmul.mubr.f32.gmra.mrb[0].mxu0 %v128
  %v858 = vpop.f32.mrb[0].mxu0
  %v859 = vadd.f32 0.0, %v858
  %v860 = vpop.f32.mrb[0].mxu0
  %861 = vmatprep.mubr.f32.mxu0 0.0
  %862 = vmatmul.mubr.f32.gmra.mrb[0].mxu0 %v129
  %v863 = vpop.f32.mrb[0].mxu0
  %v864 = vadd.f32 0.0, %v863
  %v865 = vpop.f32.mrb[0].mxu0
  %866 = vmatprep.mubr.f32.mxu0 0.0
  %867 = vmatmul.mubr.f32.gmra.mrb[0].mxu0 %v130
  %v868 = vpop.f32.mrb[0].mxu0
  %v869 = vadd.f32 0.0, %v868
  %v870 = vpop.f32.mrb[0].mxu0
  %871 = vmatprep.mubr.f32.mxu0 0.0
  %872 = vmatmul.mubr.f32.gmra.mrb[0].mxu0 %v131
  %v873 = vpop.f32.mrb[0].mxu0
  %v874 = vadd.f32 0.0, %v873
  %v875 = vpop.f32.mrb[0].mxu0
  %876 = vmatprep.mubr.f32.mxu0 0.0
  %877 = vmatmul.mubr.f32.gmra.mrb[0].mxu0 %v132
  %v878 = vpop.f32.mrb[0].mxu0
  %v879 = vadd.f32 0.0, %v878
  %v880 = vpop.f32.mrb[0].mxu0
  %881 = vmatprep.mubr.f32.mxu0 0.0
  %882 = vmatmul.mubr.f32.gmra.mrb[0].mxu0 %v133
  %v883 = vpop.f32.mrb[0].mxu0
  %v884 = vadd.f32 0.0, %v883
  %v885 = vpop.f32.mrb[0].mxu0
  %886 = vmatprep.mubr.f32.mxu0 0.0
  %887 = vmatmul.mubr.f32.gmra.mrb[0].mxu0 %v134
  %v888 = vpop.f32.mrb[0].mxu0
  %v889 = vadd.f32 0.0, %v888
  %v890 = vpop.f32.mrb[0].mxu0
  %891 = vmatprep.mubr.f32.mxu0 0.0
  %892 = vmatmul.mubr.f32.gmra.mrb[0].mxu0 %v135
  %v893 = vpop.f32.mrb[0].mxu0
  %v894 = vadd.f32 0.0, %v893
  %v895 = vpop.f32.mrb[0].mxu0
  %896 = vmatprep.mubr.f32.mxu0 0.0
  %897 = vmatmul.mubr.f32.gmra.mrb[0].mxu0 %v136
  %v898 = vpop.f32.mrb[0].mxu0
  %v899 = vadd.f32 0.0, %v898
  %v900 = vpop.f32.mrb[0].mxu0
  %901 = vmatprep.mubr.f32.mxu0 0.0
  %902 = vmatmul.mubr.f32.gmra.mrb[0].mxu0 %v137
  %v903 = vpop.f32.mrb[0].mxu0
  %v904 = vadd.f32 0.0, %v903
  %v905 = vpop.f32.mrb[0].mxu0
  %906 = vmatprep.mubr.f32.mxu0 0.0
  %907 = vmatmul.mubr.f32.gmra.mrb[0].mxu0 %v138
  %v908 = vpop.f32.mrb[0].mxu0
  %v909 = vadd.f32 0.0, %v908
  %v910 = vpop.f32.mrb[0].mxu0
  %911 = vmatprep.mubr.f32.mxu0 0.0
  %912 = vmatmul.mubr.f32.gmra.mrb[0].mxu0 %v139
  %v913 = vpop.f32.mrb[0].mxu0
  %v914 = vadd.f32 0.0, %v913
  %v915 = vpop.f32.mrb[0].mxu0
  %916 = vmatprep.mubr.f32.mxu0 0.0
  %917 = vmatmul.mubr.f32.gmra.mrb[0].mxu0 %v140
  %v918 = vpop.f32.mrb[0].mxu0
  %v919 = vadd.f32 0.0, %v918
  %v920 = vpop.f32.mrb[0].mxu0
  %921 = vmatprep.mubr.f32.mxu0 0.0
  %922 = vmatmul.mubr.f32.gmra.mrb[0].mxu0 %v141
  %v923 = vpop.f32.mrb[0].mxu0
  %v924 = vadd.f32 0.0, %v923
  %v925 = vpop.f32.mrb[0].mxu0
  %926 = vmatprep.mubr.f32.mxu0 0.0
  %927 = vmatmul.mubr.f32.gmra.mrb[0].mxu0 %v142
  %v928 = vpop.f32.mrb[0].mxu0
  %v929 = vadd.f32 0.0, %v928
  %v930 = vpop.f32.mrb[0].mxu0
  %931 = vmatprep.mubr.f32.mxu0 0.0
  %932 = vmatmul.mubr.f32.gmra.mrb[0].mxu0 %v143
  %v933 = vpop.f32.mrb[0].mxu0
  %v934 = vadd.f32 0.0, %v933
  %v935 = vpop.f32.mrb[0].mxu0
  %936 = vmatprep.mubr.f32.mxu0 0.0
  %937 = vmatmul.mubr.f32.gmra.mrb[0].mxu0 %v144
  %v938 = vpop.f32.mrb[0].mxu0
  %v939 = vadd.f32 0.0, %v938
  %v940 = vpop.f32.mrb[0].mxu0
  %941 = vmatprep.mubr.f32.mxu0 0.0
  %942 = vmatmul.mubr.f32.gmra.mrb[0].mxu0 %v145
  %v943 = vpop.f32.mrb[0].mxu0
  %v944 = vadd.f32 0.0, %v943
  %v945 = vpop.f32.mrb[0].mxu0
  %946 = vmatprep.mubr.f32.mxu0 0.0
  %947 = vmatmul.mubr.f32.gmra.mrb[0].mxu0 %v146
  %v948 = vpop.f32.mrb[0].mxu0
  %v949 = vadd.f32 0.0, %v948
  %v950 = vpop.f32.mrb[0].mxu0
  %951 = vmatprep.mubr.f32.mxu0 0.0
  %952 = vmatmul.mubr.f32.gmra.mrb[0].mxu0 %v147
  %v953 = vpop.f32.mrb[0].mxu0
  %v954 = vadd.f32 0.0, %v953
  %v955 = vpop.f32.mrb[0].mxu0
  %956 = vmatprep.mubr.f32.mxu0 0.0
  %957 = vmatmul.mubr.f32.gmra.mrb[0].mxu0 %v148
  %v958 = vpop.f32.mrb[0].mxu0
  %v959 = vadd.f32 0.0, %v958
  %v960 = vpop.f32.mrb[0].mxu0
  %961 = vmatprep.mubr.f32.mxu0 0.0
  %962 = vmatmul.mubr.f32.gmra.mrb[0].mxu0 %v149
  %v963 = vpop.f32.mrb[0].mxu0
  %v964 = vadd.f32 0.0, %v963
  %v965 = vpop.f32.mrb[0].mxu0
  %966 = vmatprep.mubr.f32.mxu0 0.0
  %967 = vmatmul.mubr.f32.gmra.mrb[0].mxu0 %v150
  %v968 = vpop.f32.mrb[0].mxu0
  %v969 = vadd.f32 0.0, %v968
  %v970 = vpop.f32.mrb[0].mxu0
  %971 = vmatprep.mubr.f32.mxu0 0.0
  %972 = vmatmul.mubr.f32.gmra.mrb[0].mxu0 %v151
  %v973 = vpop.f32.mrb[0].mxu0
  %v974 = vadd.f32 0.0, %v973
  %v975 = vpop.f32.mrb[0].mxu0
  %976 = vmatprep.mubr.f32.mxu0 0.0
  %977 = vmatmul.mubr.f32.gmra.mrb[0].mxu0 %v152
  %v978 = vpop.f32.mrb[0].mxu0
  %v979 = vadd.f32 0.0, %v978
  %v980 = vpop.f32.mrb[0].mxu0
  %981 = vmatprep.mubr.f32.mxu0 0.0
  %982 = vmatmul.mubr.f32.gmra.mrb[0].mxu0 %v153
  %v983 = vpop.f32.mrb[0].mxu0
  %v984 = vadd.f32 0.0, %v983
  %v985 = vpop.f32.mrb[0].mxu0
  %986 = vmatprep.mubr.f32.mxu0 0.0
  %987 = vmatmul.mubr.f32.gmra.mrb[0].mxu0 %v154
  %v988 = vpop.f32.mrb[0].mxu0
  %v989 = vadd.f32 0.0, %v988
  %v990 = vpop.f32.mrb[0].mxu0
  %991 = vmatprep.mubr.f32.mxu0 0.0
  %992 = vmatmul.mubr.f32.gmra.mrb[0].mxu0 %v155
  %v993 = vpop.f32.mrb[0].mxu0
  %v994 = vadd.f32 0.0, %v993
  %v995 = vpop.f32.mrb[0].mxu0
  %996 = vmatprep.mubr.f32.mxu0 0.0
  %997 = vmatmul.mubr.f32.gmra.mrb[0].mxu0 %v156
  %v998 = vpop.f32.mrb[0].mxu0
  %v999 = vadd.f32 0.0, %v998
  %v1000 = vpop.f32.mrb[0].mxu0
  %1001 = vmatprep.mubr.f32.mxu0 0.0
  %1002 = vmatmul.mubr.f32.gmra.mrb[0].mxu0 %v157
  %v1003 = vpop.f32.mrb[0].mxu0
  %v1004 = vadd.f32 0.0, %v1003
  %v1005 = vpop.f32.mrb[0].mxu0
  %1006 = vmatprep.mubr.f32.mxu0 0.0
  %1007 = vmatmul.mubr.f32.gmra.mrb[0].mxu0 %v158
  %v1008 = vpop.f32.mrb[0].mxu0
  %v1009 = vadd.f32 0.0, %v1008
  %v1010 = vpop.f32.mrb[0].mxu0
  %1011 = vmatprep.mubr.f32.mxu0 0.0
  %1012 = vmatmul.mubr.f32.gmra.mrb[0].mxu0 %v159
  %v1013 = vpop.f32.mrb[0].mxu0
  %v1014 = vadd.f32 0.0, %v1013
  %v1015 = vpop.f32.mrb[0].mxu0
  %1016 = vmatprep.mubr.f32.mxu0 0.0
  %1017 = vmatmul.mubr.f32.gmra.mrb[0].mxu0 %v160
  %v1018 = vpop.f32.mrb[0].mxu0
  %v1019 = vadd.f32 0.0, %v1018
  %v1020 = vpop.f32.mrb[0].mxu0
  %1021 = vmatprep.mubr.f32.mxu0 0.0
  %1022 = vmatmul.mubr.f32.gmra.mrb[0].mxu0 %v161
  %v1023 = vpop.f32.mrb[0].mxu0
  %v1024 = vadd.f32 0.0, %v1023
  %v1025 = vpop.f32.mrb[0].mxu0
  %1026 = vmatprep.mubr.f32.mxu0 0.0
  %1027 = vmatmul.mubr.f32.gmra.mrb[0].mxu0 %v162
  %v1028 = vpop.f32.mrb[0].mxu0
  %v1029 = vadd.f32 0.0, %v1028
  %v1030 = vpop.f32.mrb[0].mxu0
  %1031 = vmatprep.mubr.f32.mxu0 0.0
  %1032 = vmatmul.mubr.f32.gmra.mrb[0].mxu0 %v163
  %v1033 = vpop.f32.mrb[0].mxu0
  %v1034 = vadd.f32 0.0, %v1033
  %v1035 = vpop.f32.mrb[0].mxu0
  %1036 = vmatprep.mubr.f32.mxu0 0.0
  %1037 = vmatmul.mubr.f32.gmra.mrb[0].mxu0 %v164
  %v1038 = vpop.f32.mrb[0].mxu0
  %v1039 = vadd.f32 0.0, %v1038
  %v1040 = vpop.f32.mrb[0].mxu0
  %1041 = vmatprep.mubr.f32.mxu0 0.0
  %1042 = vmatmul.mubr.f32.gmra.mrb[0].mxu0 %v165
  %v1043 = vpop.f32.mrb[0].mxu0
  %v1044 = vadd.f32 0.0, %v1043
  %v1045 = vpop.f32.mrb[0].mxu0
  %1046 = vmatprep.mubr.f32.mxu0 0.0
  %1047 = vmatmul.mubr.f32.gmra.mrb[0].mxu0 %v166
  %v1048 = vpop.f32.mrb[0].mxu0
  %v1049 = vadd.f32 0.0, %v1048
  %v1050 = vpop.f32.mrb[0].mxu0
  %1051 = vmatprep.mubr.f32.mxu0 0.0
  %1052 = vmatmul.mubr.f32.gmra.mrb[0].mxu0 %v167
  %v1053 = vpop.f32.mrb[0].mxu0
  %v1054 = vadd.f32 0.0, %v1053
  %v1055 = vpop.f32.mrb[0].mxu0
  %1056 = vmatprep.mubr.f32.mxu0 0.0
  %1057 = vmatmul.mubr.f32.gmra.mrb[0].mxu0 %v168
  %v1058 = vpop.f32.mrb[0].mxu0
  %v1059 = vadd.f32 0.0, %v1058
  %v1060 = vpop.f32.mrb[0].mxu0
  %1061 = vmatprep.mubr.f32.mxu0 0.0
  %1062 = vmatmul.mubr.f32.gmra.mrb[0].mxu0 %v169
  %v1063 = vpop.f32.mrb[0].mxu0
  %v1064 = vadd.f32 0.0, %v1063
  %v1065 = vpop.f32.mrb[0].mxu0
  %1066 = vmatprep.mubr.f32.mxu0 0.0
  %1067 = vmatmul.mubr.f32.gmra.mrb[0].mxu0 %v170
  %v1068 = vpop.f32.mrb[0].mxu0
  %v1069 = vadd.f32 0.0, %v1068
  %v1070 = vpop.f32.mrb[0].mxu0
  %1071 = vmatprep.mubr.f32.mxu0 0.0
  %1072 = vmatmul.mubr.f32.gmra.mrb[0].mxu0 %v171
  %v1073 = vpop.f32.mrb[0].mxu0
  %v1074 = vadd.f32 0.0, %v1073
  %v1075 = vpop.f32.mrb[0].mxu0
  %1076 = vmatprep.mubr.f32.mxu0 0.0
  %1077 = vmatmul.mubr.f32.gmra.mrb[0].mxu0 %v172
  %v1078 = vpop.f32.mrb[0].mxu0
  %v1079 = vadd.f32 0.0, %v1078
  %v1080 = vpop.f32.mrb[0].mxu0
  %1081 = vmatprep.mubr.f32.mxu0 0.0
  %1082 = vmatmul.mubr.f32.gmra.mrb[0].mxu0 %v173
  %v1083 = vpop.f32.mrb[0].mxu0
  %v1084 = vadd.f32 0.0, %v1083
  %v1085 = vpop.f32.mrb[0].mxu0
  %1086 = vmatprep.mubr.f32.mxu0 0.0
  %1087 = vmatmul.mubr.f32.gmra.mrb[0].mxu0 %v174
  %v1088 = vpop.f32.mrb[0].mxu0
  %v1089 = vadd.f32 0.0, %v1088
  %v1090 = vpop.f32.mrb[0].mxu0
  %1091 = vmatprep.mubr.f32.mxu0 0.0
  %1092 = vmatmul.mubr.f32.gmra.mrb[0].mxu0 %v175
  %v1093 = vpop.f32.mrb[0].mxu0
  %v1094 = vadd.f32 0.0, %v1093
  %v1095 = vpop.f32.mrb[0].mxu0
  %1096 = vmatprep.mubr.f32.mxu0 0.0
  %1097 = vmatmul.mubr.f32.gmra.mrb[0].mxu0 %v176
  %v1098 = vpop.f32.mrb[0].mxu0
  %v1099 = vadd.f32 0.0, %v1098
  %v1100 = vpop.f32.mrb[0].mxu0
  %1101 = vmatprep.mubr.f32.mxu0 0.0
  %1102 = vmatmul.mubr.f32.gmra.mrb[0].mxu0 %v177
  %v1103 = vpop.f32.mrb[0].mxu0
  %v1104 = vadd.f32 0.0, %v1103
  %v1105 = vpop.f32.mrb[0].mxu0
  %1106 = vmatprep.mubr.f32.mxu0 0.0
  %1107 = vmatmul.mubr.f32.gmra.mrb[0].mxu0 %v178
  %v1108 = vpop.f32.mrb[0].mxu0
  %v1109 = vadd.f32 0.0, %v1108
  %v1110 = vpop.f32.mrb[0].mxu0
  %1111 = vmatprep.mubr.f32.mxu0 0.0
  %1112 = vmatmul.mubr.f32.gmra.mrb[0].mxu0 %v179
  %v1113 = vpop.f32.mrb[0].mxu0
  %v1114 = vadd.f32 0.0, %v1113
  %v1115 = vpop.f32.mrb[0].mxu0
  %1116 = vmatprep.mubr.f32.mxu0 0.0
  %1117 = vmatmul.mubr.f32.gmra.mrb[0].mxu0 %v180
  %v1118 = vpop.f32.mrb[0].mxu0
  %v1119 = vadd.f32 0.0, %v1118
  %v1120 = vpop.f32.mrb[0].mxu0
  %1121 = vmatprep.mubr.f32.mxu0 0.0
  %1122 = vmatmul.mubr.f32.gmra.mrb[0].mxu0 %v181
  %v1123 = vpop.f32.mrb[0].mxu0
  %v1124 = vadd.f32 0.0, %v1123
  %v1125 = vpop.f32.mrb[0].mxu0
  %1126 = vmatprep.mubr.f32.mxu0 0.0
  %1127 = vmatmul.mubr.f32.gmra.mrb[0].mxu0 %v182
  %v1128 = vpop.f32.mrb[0].mxu0
  %v1129 = vadd.f32 0.0, %v1128
  %v1130 = vpop.f32.mrb[0].mxu0
  %1131 = vmatprep.mubr.f32.mxu0 0.0
  %1132 = vmatmul.mubr.f32.gmra.mrb[0].mxu0 %v183
  %v1133 = vpop.f32.mrb[0].mxu0
  %v1134 = vadd.f32 0.0, %v1133
  %v1135 = vpop.f32.mrb[0].mxu0
  %1136 = vmatprep.mubr.f32.mxu0 0.0
  %1137 = vmatmul.mubr.f32.gmra.mrb[0].mxu0 %v184
  %v1138 = vpop.f32.mrb[0].mxu0
  %v1139 = vadd.f32 0.0, %v1138
  %v1140 = vpop.f32.mrb[0].mxu0
  %1141 = vmatprep.mubr.f32.mxu0 0.0
  %1142 = vmatmul.mubr.f32.gmra.mrb[0].mxu0 %v185
  %v1143 = vpop.f32.mrb[0].mxu0
  %v1144 = vadd.f32 0.0, %v1143
  %v1145 = vpop.f32.mrb[0].mxu0
  %1146 = vmatprep.mubr.f32.mxu0 0.0
  %1147 = vmatmul.mubr.f32.gmra.mrb[0].mxu0 %v186
  %v1148 = vpop.f32.mrb[0].mxu0
  %v1149 = vadd.f32 0.0, %v1148
  %v1150 = vpop.f32.mrb[0].mxu0
  %1151 = vmatprep.mubr.f32.mxu0 0.0
  %1152 = vmatmul.mubr.f32.gmra.mrb[0].mxu0 %v187
  %v1153 = vpop.f32.mrb[0].mxu0
  %v1154 = vadd.f32 0.0, %v1153
  %v1155 = vpop.f32.mrb[0].mxu0
  %1156 = vmatprep.mubr.f32.mxu0 0.0
  %1157 = vmatmul.mubr.f32.gmra.mrb[0].mxu0 %v188
  %v1158 = vpop.f32.mrb[0].mxu0
  %v1159 = vadd.f32 0.0, %v1158
  %v1160 = vpop.f32.mrb[0].mxu0
  %1161 = vmatprep.mubr.f32.mxu0 0.0
  %1162 = vmatmul.mubr.f32.gmra.mrb[0].mxu0 %v189
  %v1163 = vpop.f32.mrb[0].mxu0
  %v1164 = vadd.f32 0.0, %v1163
  %v1165 = vpop.f32.mrb[0].mxu0
  %1166 = vmatprep.mubr.f32.mxu0 0.0
  %1167 = vmatmul.mubr.f32.gmra.mrb[0].mxu0 %v190
  %v1168 = vpop.f32.mrb[0].mxu0
  %v1169 = vadd.f32 0.0, %v1168
  %v1170 = vpop.f32.mrb[0].mxu0
  %1171 = vmatprep.mubr.f32.mxu0 0.0
  %1172 = vmatmul.mubr.f32.gmra.mrb[0].mxu0 %v191
  %v1173 = vpop.f32.mrb[0].mxu0
  %v1174 = vadd.f32 0.0, %v1173
  %v1175 = vpop.f32.mrb[0].mxu0
  %1176 = vmatprep.mubr.f32.mxu0 0.0
  %1177 = vmatmul.mubr.f32.gmra.mrb[0].mxu0 %v192
  %v1178 = vpop.f32.mrb[0].mxu0
  %v1179 = vadd.f32 0.0, %v1178
  %v1180 = vpop.f32.mrb[0].mxu0
  %1181 = vmatprep.mubr.f32.mxu0 0.0
  %1182 = vmatmul.mubr.f32.gmra.mrb[0].mxu0 %v193
  %v1183 = vpop.f32.mrb[0].mxu0
  %v1184 = vadd.f32 0.0, %v1183
  %v1185 = vpop.f32.mrb[0].mxu0
  %1186 = vmatprep.mubr.f32.mxu0 0.0
  %1187 = vmatmul.mubr.f32.gmra.mrb[0].mxu0 %v194
  %v1188 = vpop.f32.mrb[0].mxu0
  %v1189 = vadd.f32 0.0, %v1188
  %v1190 = vpop.f32.mrb[0].mxu0
  %1191 = vmatprep.mubr.f32.mxu0 0.0
  %1192 = vmatmul.mubr.f32.gmra.mrb[0].mxu0 %v195
  %v1193 = vpop.f32.mrb[0].mxu0
  %v1194 = vadd.f32 0.0, %v1193
  %v1195 = vpop.f32.mrb[0].mxu0
  %1196 = vmatprep.mubr.f32.mxu0 0.0
  %1197 = vmatmul.mubr.f32.gmra.mrb[0].mxu0 %v196
  %v1198 = vpop.f32.mrb[0].mxu0
  %v1199 = vadd.f32 0.0, %v1198
  %v1200 = vpop.f32.mrb[0].mxu0
  %1201 = vmatprep.mubr.f32.mxu0 0.0
  %1202 = vmatmul.mubr.f32.gmra.mrb[0].mxu0 %v197
  %v1203 = vpop.f32.mrb[0].mxu0
  %v1204 = vadd.f32 0.0, %v1203
  %v1205 = vpop.f32.mrb[0].mxu0
  %1206 = vmatprep.mubr.f32.mxu0 0.0
  %1207 = vmatmul.mubr.f32.gmra.mrb[0].mxu0 %v198
  %v1208 = vpop.f32.mrb[0].mxu0
  %v1209 = vadd.f32 0.0, %v1208
  %v1210 = vpop.f32.mrb[0].mxu0
  %1211 = vmatprep.mubr.f32.mxu0 0.0
  %1212 = vmatmul.mubr.f32.gmra.mrb[0].mxu0 %v199
  %v1213 = vpop.f32.mrb[0].mxu0
  %v1214 = vadd.f32 0.0, %v1213
  %v1215 = vpop.f32.mrb[0].mxu0
  %1216 = vmatprep.mubr.f32.mxu0 0.0
  %1217 = vmatmul.mubr.f32.gmra.mrb[0].mxu0 %v200
  %v1218 = vpop.f32.mrb[0].mxu0
  %v1219 = vadd.f32 0.0, %v1218
  %v1220 = vpop.f32.mrb[0].mxu0
  %1221 = vmatprep.mubr.f32.mxu0 0.0
  %1222 = vmatmul.mubr.f32.gmra.mrb[0].mxu0 %v201
  %v1223 = vpop.f32.mrb[0].mxu0
  %v1224 = vadd.f32 0.0, %v1223
  %v1225 = vpop.f32.mrb[0].mxu0
  %1226 = vmatprep.mubr.f32.mxu0 0.0
  %1227 = vmatmul.mubr.f32.gmra.mrb[0].mxu0 %v202
  %v1228 = vpop.f32.mrb[0].mxu0
  %v1229 = vadd.f32 0.0, %v1228
  %v1230 = vpop.f32.mrb[0].mxu0
  %1231 = vmatprep.mubr.f32.mxu0 0.0
  %1232 = vmatmul.mubr.f32.gmra.mrb[0].mxu0 %v203
  %v1233 = vpop.f32.mrb[0].mxu0
  %v1234 = vadd.f32 0.0, %v1233
  %v1235 = vpop.f32.mrb[0].mxu0
  %1236 = vmatprep.mubr.f32.mxu0 0.0
  %1237 = vmatmul.mubr.f32.gmra.mrb[0].mxu0 %v204
  %v1238 = vpop.f32.mrb[0].mxu0
  %v1239 = vadd.f32 0.0, %v1238
  %v1240 = vpop.f32.mrb[0].mxu0
  %1241 = vmatprep.mubr.f32.mxu0 0.0
  %1242 = vmatmul.mubr.f32.gmra.mrb[0].mxu0 %v205
  %v1243 = vpop.f32.mrb[0].mxu0
  %v1244 = vadd.f32 0.0, %v1243
  %v1245 = vpop.f32.mrb[0].mxu0
  %1246 = vdwg.mxu0
  %v1247 = vmax.f32 %v289, %v529
  %v1248 = vmax.f32 %v294, %v534
  %v1249 = vmax.f32 %v299, %v539
  %v1250 = vmax.f32 %v304, %v544
  %v1251 = vmax.f32 %v309, %v549
  %v1252 = vmax.f32 %v314, %v554
  %v1253 = vmax.f32 %v319, %v559
  %v1254 = vmax.f32 %v324, %v564
  %v1255 = vmax.f32 %v329, %v569
  %v1256 = vmax.f32 %v334, %v574
  %v1257 = vmax.f32 %v339, %v579
  %v1258 = vmax.f32 %v344, %v584
  %v1259 = vmax.f32 %v349, %v589
  %v1260 = vmax.f32 %v354, %v594
  %v1261 = vmax.f32 %v359, %v599
  %v1262 = vmax.f32 %v364, %v604
  %v1263 = vmax.f32 %v369, %v609
  %v1264 = vmax.f32 %v374, %v614
  %v1265 = vmax.f32 %v379, %v619
  %v1266 = vmax.f32 %v384, %v624
  %v1267 = vmax.f32 %v389, %v629
  %v1268 = vmax.f32 %v394, %v634
  %v1269 = vmax.f32 %v399, %v639
  %v1270 = vmax.f32 %v404, %v644
  %v1271 = vmax.f32 %v409, %v649
  %v1272 = vmax.f32 %v414, %v654
  %v1273 = vmax.f32 %v419, %v659
  %v1274 = vmax.f32 %v424, %v664
  %v1275 = vmax.f32 %v429, %v669
  %v1276 = vmax.f32 %v434, %v674
  %v1277 = vmax.f32 %v439, %v679
  %v1278 = vmax.f32 %v444, %v684
  %v1279 = vmax.f32 %v449, %v689
  %v1280 = vmax.f32 %v454, %v694
  %v1281 = vmax.f32 %v459, %v699
  %v1282 = vmax.f32 %v464, %v704
  %v1283 = vmax.f32 %v469, %v709
  %v1284 = vmax.f32 %v474, %v714
  %v1285 = vmax.f32 %v479, %v719
  %v1286 = vmax.f32 %v484, %v724
  %v1287 = vmax.f32 %v489, %v729
  %v1288 = vmax.f32 %v494, %v734
  %v1289 = vmax.f32 %v499, %v739
  %v1290 = vmax.f32 %v504, %v744
  %v1291 = vmax.f32 %v509, %v749
  %v1292 = vmax.f32 %v514, %v754
  %v1293 = vmax.f32 %v519, %v759
  %v1294 = vmax.f32 %v524, %v764
  %v1295 = vmax.f32 %v769, %v1009
  %v1296 = vmax.f32 %v774, %v1014
  %v1297 = vmax.f32 %v779, %v1019
  %v1298 = vmax.f32 %v784, %v1024
  %v1299 = vmax.f32 %v789, %v1029
  %v1300 = vmax.f32 %v794, %v1034
  %v1301 = vmax.f32 %v799, %v1039
  %v1302 = vmax.f32 %v804, %v1044
  %v1303 = vmax.f32 %v809, %v1049
  %v1304 = vmax.f32 %v814, %v1054
  %v1305 = vmax.f32 %v819, %v1059
  %v1306 = vmax.f32 %v824, %v1064
  %v1307 = vmax.f32 %v829, %v1069
  %v1308 = vmax.f32 %v834, %v1074
  %v1309 = vmax.f32 %v839, %v1079
  %v1310 = vmax.f32 %v844, %v1084
  %v1311 = vmax.f32 %v849, %v1089
  %v1312 = vmax.f32 %v854, %v1094
  %v1313 = vmax.f32 %v859, %v1099
  %v1314 = vmax.f32 %v864, %v1104
  %v1315 = vmax.f32 %v869, %v1109
  %v1316 = vmax.f32 %v874, %v1114
  %v1317 = vmax.f32 %v879, %v1119
  %v1318 = vmax.f32 %v884, %v1124
  %v1319 = vmax.f32 %v889, %v1129
  %v1320 = vmax.f32 %v894, %v1134
  %v1321 = vmax.f32 %v899, %v1139
  %v1322 = vmax.f32 %v904, %v1144
  %v1323 = vmax.f32 %v909, %v1149
  %v1324 = vmax.f32 %v914, %v1154
  %v1325 = vmax.f32 %v919, %v1159
  %v1326 = vmax.f32 %v924, %v1164
  %v1327 = vmax.f32 %v929, %v1169
  %v1328 = vmax.f32 %v934, %v1174
  %v1329 = vmax.f32 %v939, %v1179
  %v1330 = vmax.f32 %v944, %v1184
  %v1331 = vmax.f32 %v949, %v1189
  %v1332 = vmax.f32 %v954, %v1194
  %v1333 = vmax.f32 %v959, %v1199
  %v1334 = vmax.f32 %v964, %v1204
  %v1335 = vmax.f32 %v969, %v1209
  %v1336 = vmax.f32 %v974, %v1214
  %v1337 = vmax.f32 %v979, %v1219
  %v1338 = vmax.f32 %v984, %v1224
  %v1339 = vmax.f32 %v989, %v1229
  %v1340 = vmax.f32 %v994, %v1234
  %v1341 = vmax.f32 %v999, %v1239
  %v1342 = vmax.f32 %v1004, %v1244
  %v1343 = vmax.f32 %v1247, %v1295
  %v1344 = vmax.f32 %v1248, %v1296
  %v1345 = vmax.f32 %v1249, %v1297
  %v1346 = vmax.f32 %v1250, %v1298
  %v1347 = vmax.f32 %v1251, %v1299
  %v1348 = vmax.f32 %v1252, %v1300
  %v1349 = vmax.f32 %v1253, %v1301
  %v1350 = vmax.f32 %v1254, %v1302
  %v1351 = vmax.f32 %v1255, %v1303
  %v1352 = vmax.f32 %v1256, %v1304
  %v1353 = vmax.f32 %v1257, %v1305
  %v1354 = vmax.f32 %v1258, %v1306
  %v1355 = vmax.f32 %v1259, %v1307
  %v1356 = vmax.f32 %v1260, %v1308
  %v1357 = vmax.f32 %v1261, %v1309
  %v1358 = vmax.f32 %v1262, %v1310
  %v1359 = vmax.f32 %v1263, %v1311
  %v1360 = vmax.f32 %v1264, %v1312
  %v1361 = vmax.f32 %v1265, %v1313
  %v1362 = vmax.f32 %v1266, %v1314
  %v1363 = vmax.f32 %v1267, %v1315
  %v1364 = vmax.f32 %v1268, %v1316
  %v1365 = vmax.f32 %v1269, %v1317
  %v1366 = vmax.f32 %v1270, %v1318
  %v1367 = vmax.f32 %v1271, %v1319
  %v1368 = vmax.f32 %v1272, %v1320
  %v1369 = vmax.f32 %v1273, %v1321
  %v1370 = vmax.f32 %v1274, %v1322
  %v1371 = vmax.f32 %v1275, %v1323
  %v1372 = vmax.f32 %v1276, %v1324
  %v1373 = vmax.f32 %v1277, %v1325
  %v1374 = vmax.f32 %v1278, %v1326
  %v1375 = vmax.f32 %v1279, %v1327
  %v1376 = vmax.f32 %v1280, %v1328
  %v1377 = vmax.f32 %v1281, %v1329
  %v1378 = vmax.f32 %v1282, %v1330
  %v1379 = vmax.f32 %v1283, %v1331
  %v1380 = vmax.f32 %v1284, %v1332
  %v1381 = vmax.f32 %v1285, %v1333
  %v1382 = vmax.f32 %v1286, %v1334
  %v1383 = vmax.f32 %v1287, %v1335
  %v1384 = vmax.f32 %v1288, %v1336
  %v1385 = vmax.f32 %v1289, %v1337
  %v1386 = vmax.f32 %v1290, %v1338
  %v1387 = vmax.f32 %v1291, %v1339
  %v1388 = vmax.f32 %v1292, %v1340
  %v1389 = vmax.f32 %v1293, %v1341
  %v1390 = vmax.f32 %v1294, %v1342
  %v1391 = vld [vmem:[%s2] sm:$0x1]
  %v1393 = vlaneseq
  %v1394 = vshrl.u32 %v1393, 7
  %v1395 = vsub.s32 0, %v1394
  %v1396 = vrot.slane %v1391, %v1395
  %v1398 = vadd.f32 %v1343, %v1396
  %v1399 = vadd.f32 %v1344, %v1396
  %v1400 = vadd.f32 %v1345, %v1396
  %v1401 = vadd.f32 %v1346, %v1396
  %v1402 = vadd.f32 %v1347, %v1396
  %v1403 = vadd.f32 %v1348, %v1396
  %v1404 = vadd.f32 %v1349, %v1396
  %v1405 = vadd.f32 %v1350, %v1396
  %v1406 = vadd.f32 %v1351, %v1396
  %v1407 = vadd.f32 %v1352, %v1396
  %v1408 = vadd.f32 %v1353, %v1396
  %v1409 = vadd.f32 %v1354, %v1396
  %v1410 = vadd.f32 %v1355, %v1396
  %v1411 = vadd.f32 %v1356, %v1396
  %v1412 = vadd.f32 %v1357, %v1396
  %v1413 = vadd.f32 %v1358, %v1396
  %v1414 = vadd.f32 %v1359, %v1396
  %v1415 = vadd.f32 %v1360, %v1396
  %v1416 = vadd.f32 %v1361, %v1396
  %v1417 = vadd.f32 %v1362, %v1396
  %v1418 = vadd.f32 %v1363, %v1396
  %v1419 = vadd.f32 %v1364, %v1396
  %v1420 = vadd.f32 %v1365, %v1396
  %v1421 = vadd.f32 %v1366, %v1396
  %v1422 = vadd.f32 %v1367, %v1396
  %v1423 = vadd.f32 %v1368, %v1396
  %v1424 = vadd.f32 %v1369, %v1396
  %v1425 = vadd.f32 %v1370, %v1396
  %v1426 = vadd.f32 %v1371, %v1396
  %v1427 = vadd.f32 %v1372, %v1396
  %v1428 = vadd.f32 %v1373, %v1396
  %v1429 = vadd.f32 %v1374, %v1396
  %v1430 = vadd.f32 %v1375, %v1396
  %v1431 = vadd.f32 %v1376, %v1396
  %v1432 = vadd.f32 %v1377, %v1396
  %v1433 = vadd.f32 %v1378, %v1396
  %v1434 = vadd.f32 %v1379, %v1396
  %v1435 = vadd.f32 %v1380, %v1396
  %v1436 = vadd.f32 %v1381, %v1396
  %v1437 = vadd.f32 %v1382, %v1396
  %v1438 = vadd.f32 %v1383, %v1396
  %v1439 = vadd.f32 %v1384, %v1396
  %v1440 = vadd.f32 %v1385, %v1396
  %v1441 = vadd.f32 %v1386, %v1396
  %v1442 = vadd.f32 %v1387, %v1396
  %v1443 = vadd.f32 %v1388, %v1396
  %v1444 = vadd.f32 %v1389, %v1396
  %v1445 = vadd.f32 %v1390, %v1396
  %v1446 = vmax.f32 %v1398, 0.0
  %v1447 = vmax.f32 %v1399, 0.0
  %v1448 = vmax.f32 %v1400, 0.0
  %v1449 = vmax.f32 %v1401, 0.0
  %v1450 = vmax.f32 %v1402, 0.0
  %v1451 = vmax.f32 %v1403, 0.0
  %v1452 = vmax.f32 %v1404, 0.0
  %v1453 = vmax.f32 %v1405, 0.0
  %v1454 = vmax.f32 %v1406, 0.0
  %v1455 = vmax.f32 %v1407, 0.0
  %v1456 = vmax.f32 %v1408, 0.0
  %v1457 = vmax.f32 %v1409, 0.0
  %v1458 = vmax.f32 %v1410, 0.0
  %v1459 = vmax.f32 %v1411, 0.0
  %v1460 = vmax.f32 %v1412, 0.0
  %v1461 = vmax.f32 %v1413, 0.0
  %v1462 = vmax.f32 %v1414, 0.0
  %v1463 = vmax.f32 %v1415, 0.0
  %v1464 = vmax.f32 %v1416, 0.0
  %v1465 = vmax.f32 %v1417, 0.0
  %v1466 = vmax.f32 %v1418, 0.0
  %v1467 = vmax.f32 %v1419, 0.0
  %v1468 = vmax.f32 %v1420, 0.0
  %v1469 = vmax.f32 %v1421, 0.0
  %v1470 = vmax.f32 %v1422, 0.0
  %v1471 = vmax.f32 %v1423, 0.0
  %v1472 = vmax.f32 %v1424, 0.0
  %v1473 = vmax.f32 %v1425, 0.0
  %v1474 = vmax.f32 %v1426, 0.0
  %v1475 = vmax.f32 %v1427, 0.0
  %v1476 = vmax.f32 %v1428, 0.0
  %v1477 = vmax.f32 %v1429, 0.0
  %v1478 = vmax.f32 %v1430, 0.0
  %v1479 = vmax.f32 %v1431, 0.0
  %v1480 = vmax.f32 %v1432, 0.0
  %v1481 = vmax.f32 %v1433, 0.0
  %v1482 = vmax.f32 %v1434, 0.0
  %v1483 = vmax.f32 %v1435, 0.0
  %v1484 = vmax.f32 %v1436, 0.0
  %v1485 = vmax.f32 %v1437, 0.0
  %v1486 = vmax.f32 %v1438, 0.0
  %v1487 = vmax.f32 %v1439, 0.0
  %v1488 = vmax.f32 %v1440, 0.0
  %v1489 = vmax.f32 %v1441, 0.0
  %v1490 = vmax.f32 %v1442, 0.0
  %v1491 = vmax.f32 %v1443, 0.0
  %v1492 = vmax.f32 %v1444, 0.0
  %v1493 = vmax.f32 %v1445, 0.0
  %1494 = vst [vmem:[%s3] sm:$0xff] %v1446
  %1495 = vst [vmem:[%s3 + $0x8] sm:$0xff] %v1447
  %1496 = vst [vmem:[%s3 + $0x10] sm:$0xff] %v1448
  %1497 = vst [vmem:[%s3 + $0x18] sm:$0xff] %v1449
  %1498 = vst [vmem:[%s3 + $0x20] sm:$0xff] %v1450
  %1499 = vst [vmem:[%s3 + $0x28] sm:$0xff] %v1451
  %1500 = vst [vmem:[%s3 + $0x30] sm:$0xff] %v1452
  %1501 = vst [vmem:[%s3 + $0x38] sm:$0xff] %v1453
  %1502 = vst [vmem:[%s3 + $0x40] sm:$0xff] %v1454
  %1503 = vst [vmem:[%s3 + $0x48] sm:$0xff] %v1455
  %1504 = vst [vmem:[%s3 + $0x50] sm:$0xff] %v1456
  %1505 = vst [vmem:[%s3 + $0x58] sm:$0xff] %v1457
  %1506 = vst [vmem:[%s3 + $0x60] sm:$0xff] %v1458
  %1507 = vst [vmem:[%s3 + $0x68] sm:$0xff] %v1459
  %1508 = vst [vmem:[%s3 + $0x70] sm:$0xff] %v1460
  %1509 = vst [vmem:[%s3 + $0x78] sm:$0xff] %v1461
  %1510 = vst [vmem:[%s3 + $0x80] sm:$0xff] %v1462
  %1511 = vst [vmem:[%s3 + $0x88] sm:$0xff] %v1463
  %1512 = vst [vmem:[%s3 + $0x90] sm:$0xff] %v1464
  %1513 = vst [vmem:[%s3 + $0x98] sm:$0xff] %v1465
  %1514 = vst [vmem:[%s3 + $0xa0] sm:$0xff] %v1466
  %1515 = vst [vmem:[%s3 + $0xa8] sm:$0xff] %v1467
  %1516 = vst [vmem:[%s3 + $0xb0] sm:$0xff] %v1468
  %1517 = vst [vmem:[%s3 + $0xb8] sm:$0xff] %v1469
  %1518 = vst [vmem:[%s3 + $0xc0] sm:$0xff] %v1470
  %1519 = vst [vmem:[%s3 + $0xc8] sm:$0xff] %v1471
  %1520 = vst [vmem:[%s3 + $0xd0] sm:$0xff] %v1472
  %1521 = vst [vmem:[%s3 + $0xd8] sm:$0xff] %v1473
  %1522 = vst [vmem:[%s3 + $0xe0] sm:$0xff] %v1474
  %1523 = vst [vmem:[%s3 + $0xe8] sm:$0xff] %v1475
  %1524 = vst [vmem:[%s3 + $0xf0] sm:$0xff] %v1476
  %1525 = vst [vmem:[%s3 + $0xf8] sm:$0xff] %v1477
  %1526 = vst [vmem:[%s3 + $0x100] sm:$0xff] %v1478
  %1527 = vst [vmem:[%s3 + $0x108] sm:$0xff] %v1479
  %1528 = vst [vmem:[%s3 + $0x110] sm:$0xff] %v1480
  %1529 = vst [vmem:[%s3 + $0x118] sm:$0xff] %v1481
  %1530 = vst [vmem:[%s3 + $0x120] sm:$0xff] %v1482
  %1531 = vst [vmem:[%s3 + $0x128] sm:$0xff] %v1483
  %1532 = vst [vmem:[%s3 + $0x130] sm:$0xff] %v1484
  %1533 = vst [vmem:[%s3 + $0x138] sm:$0xff] %v1485
  %1534 = vst [vmem:[%s3 + $0x140] sm:$0xff] %v1486
  %1535 = vst [vmem:[%s3 + $0x148] sm:$0xff] %v1487
  %1536 = vst [vmem:[%s3 + $0x150] sm:$0xff] %v1488
  %1537 = vst [vmem:[%s3 + $0x158] sm:$0xff] %v1489
  %1538 = vst [vmem:[%s3 + $0x160] sm:$0xff] %v1490
  %1539 = vst [vmem:[%s3 + $0x168] sm:$0xff] %v1491
  %1540 = vst [vmem:[%s3 + $0x170] sm:$0xff] %v1492
  %1541 = vst [vmem:[%s3 + $0x178] sm:$0xff] %v1493
  // Predicated region
  $region14: #{digit_cnn_forward.2} parent=0 // pred_check
    _
  $region15: #{digit_cnn_forward.2} parent=0 // pred_check_branch
    %1543 = sbr.rel (0) target = $region17
  $region16: #{digit_cnn_forward.2} parent=0 // pred_region
    _
  $region17: #{digit_cnn_forward.2} parent=0 // pred_fallthru
    _
  // Predicated region
  $region18: #{digit_cnn_forward.2} parent=0 // pred_check
    _
  $region19: #{digit_cnn_forward.2} parent=0 // pred_check_branch
    %1545 = sbr.rel (0) target = $region21
  $region20: #{digit_cnn_forward.2} parent=0 // pred_region
    _
  $region21: #{digit_cnn_forward.2} parent=0 // pred_fallthru
    _

// kernel: digit_cnn_forward.3
$region0: #{digit_cnn_forward.3}
  #allocation0 [shape = 'u32[]', space=smem, size = 0x4, offset = 0x4, fixed_abs, tag = 'smem constant byte address 0x4 - core index']
  #allocation1 [shape = 'u32[144,128]{1,0:T(1,128)}', space=vmem, size = 0x12000, scoped, tag = 'internal scratch']
  %s0 = inlined_call_operand.vmem [shape: f32[128,256], index: 0, kind: input, shape index: {}]
  %s1 = inlined_call_operand.vmem [shape: f32[256,128], index: 1, kind: input, shape index: {}]
  %s2 = inlined_call_operand.vmem [shape: f32[1,128], index: 2, kind: input, shape index: {}]
  %s3 = inlined_call_operand.vmem [shape: f32[512,128], index: 3, kind: input, shape index: {}]
  %s4 = inlined_call_operand.vmem [shape: f32[1,128], index: 4, kind: input, shape index: {}]
  %s5 = inlined_call_operand.vmem [shape: f32[128,128], index: 5, kind: input, shape index: {}]
  %s6 = inlined_call_operand.vmem [shape: f32[1,128], index: 6, kind: input, shape index: {}]
  %s7 = inlined_call_operand.vmem [shape: f32[128,128], index: 7, kind: input, shape index: {}]
  %s8 = inlined_call_operand.vmem [shape: f32[1,128], index: 8, kind: input, shape index: {}]
  %s9 = inlined_call_operand.vmem [shape: f32[8,128], index: 9, kind: output, shape index: {}]
  %s10 = sld [smem:[#allocation0]]
  $region46: #{digit_cnn_forward.3} parent=0
    _
  %s12 = ssub.s32 1, %s10
  %s13 = scalar_select 0, %s12, %s10
  // Predicated region
  $region2: #{digit_cnn_forward.3} parent=0 // pred_check
    _
  $region3: #{digit_cnn_forward.3} parent=0 // pred_check_branch
    %15 = sbr.rel (0) target = $region5
  $region4: #{digit_cnn_forward.3} parent=0 // pred_region
    _
  $region5: #{digit_cnn_forward.3} parent=0 // pred_fallthru
    _
  // Predicated region
  $region6: #{digit_cnn_forward.3} parent=0 // pred_check
    _
  $region7: #{digit_cnn_forward.3} parent=0 // pred_check_branch
    %17 = sbr.rel (0) target = $region9
  $region8: #{digit_cnn_forward.3} parent=0 // pred_region
    _
  $region9: #{digit_cnn_forward.3} parent=0 // pred_fallthru
    _
  // Predicated region
  $region10: #{digit_cnn_forward.3} parent=0 // pred_check
    _
  $region11: #{digit_cnn_forward.3} parent=0 // pred_check_branch
    %19 = sbr.rel (0) target = $region13
  $region12: #{digit_cnn_forward.3} parent=0 // pred_region
    _
  $region13: #{digit_cnn_forward.3} parent=0 // pred_fallthru
    _
  // Predicated region
  $region14: #{digit_cnn_forward.3} parent=0 // pred_check
    _
  $region15: #{digit_cnn_forward.3} parent=0 // pred_check_branch
    %21 = sbr.rel (0) target = $region17
  $region16: #{digit_cnn_forward.3} parent=0 // pred_region
    _
  $region17: #{digit_cnn_forward.3} parent=0 // pred_fallthru
    _
  // Predicated region
  $region18: #{digit_cnn_forward.3} parent=0 // pred_check
    _
  $region19: #{digit_cnn_forward.3} parent=0 // pred_check_branch
    %23 = sbr.rel (0) target = $region21
  $region20: #{digit_cnn_forward.3} parent=0 // pred_region
    _
  $region21: #{digit_cnn_forward.3} parent=0 // pred_fallthru
    _
  // Predicated region
  $region22: #{digit_cnn_forward.3} parent=0 // pred_check
    _
  $region23: #{digit_cnn_forward.3} parent=0 // pred_check_branch
    %25 = sbr.rel (0) target = $region25
  $region24: #{digit_cnn_forward.3} parent=0 // pred_region
    _
  $region25: #{digit_cnn_forward.3} parent=0 // pred_fallthru
    _
  // Predicated region
  $region26: #{digit_cnn_forward.3} parent=0 // pred_check
    _
  $region27: #{digit_cnn_forward.3} parent=0 // pred_check_branch
    %27 = sbr.rel (0) target = $region29
  $region28: #{digit_cnn_forward.3} parent=0 // pred_region
    _
  $region29: #{digit_cnn_forward.3} parent=0 // pred_fallthru
    _
  // Predicated region
  $region30: #{digit_cnn_forward.3} parent=0 // pred_check
    _
  $region31: #{digit_cnn_forward.3} parent=0 // pred_check_branch
    %29 = sbr.rel (0) target = $region33
  $region32: #{digit_cnn_forward.3} parent=0 // pred_region
    _
  $region33: #{digit_cnn_forward.3} parent=0 // pred_fallthru
    _
  // Predicated region
  $region34: #{digit_cnn_forward.3} parent=0 // pred_check
    _
  $region35: #{digit_cnn_forward.3} parent=0 // pred_check_branch
    %31 = sbr.rel (0) target = $region37
  $region36: #{digit_cnn_forward.3} parent=0 // pred_region
    _
  $region37: #{digit_cnn_forward.3} parent=0 // pred_fallthru
    _
  %v32 = vld [vmem:[%s0] sm:$0xff]
  %v33 = vld [vmem:[%s0 + $0x8] sm:$0xff]
  %v34 = vld [vmem:[%s0 + $0x10] sm:$0xff]
  %v35 = vld [vmem:[%s0 + $0x18] sm:$0xff]
  %v36 = vld [vmem:[%s0 + $0x20] sm:$0xff]
  %v37 = vld [vmem:[%s0 + $0x28] sm:$0xff]
  %v38 = vld [vmem:[%s0 + $0x30] sm:$0xff]
  %v39 = vld [vmem:[%s0 + $0x38] sm:$0xff]
  %v40 = vld [vmem:[%s0 + $0x40] sm:$0xff]
  %v41 = vld [vmem:[%s0 + $0x48] sm:$0xff]
  %v42 = vld [vmem:[%s0 + $0x50] sm:$0xff]
  %v43 = vld [vmem:[%s0 + $0x58] sm:$0xff]
  %v44 = vld [vmem:[%s0 + $0x60] sm:$0xff]
  %v45 = vld [vmem:[%s0 + $0x68] sm:$0xff]
  %v46 = vld [vmem:[%s0 + $0x70] sm:$0xff]
  %v47 = vld [vmem:[%s0 + $0x78] sm:$0xff]
  %v48 = vld [vmem:[%s0 + $0x80] sm:$0xff]
  %v49 = vld [vmem:[%s0 + $0x88] sm:$0xff]
  %v50 = vld [vmem:[%s0 + $0x90] sm:$0xff]
  %v51 = vld [vmem:[%s0 + $0x98] sm:$0xff]
  %v52 = vld [vmem:[%s0 + $0xa0] sm:$0xff]
  %v53 = vld [vmem:[%s0 + $0xa8] sm:$0xff]
  %v54 = vld [vmem:[%s0 + $0xb0] sm:$0xff]
  %v55 = vld [vmem:[%s0 + $0xb8] sm:$0xff]
  %v56 = vld [vmem:[%s0 + $0xc0] sm:$0xff]
  %v57 = vld [vmem:[%s0 + $0xc8] sm:$0xff]
  %v58 = vld [vmem:[%s0 + $0xd0] sm:$0xff]
  %v59 = vld [vmem:[%s0 + $0xd8] sm:$0xff]
  %v60 = vld [vmem:[%s0 + $0xe0] sm:$0xff]
  %v61 = vld [vmem:[%s0 + $0xe8] sm:$0xff]
  %v62 = vld [vmem:[%s0 + $0xf0] sm:$0xff]
  %v63 = vld [vmem:[%s0 + $0xf8] sm:$0xff]
  %v64 = vld [vmem:[%s1] sm:$0xff]
  %v65 = vld [vmem:[%s1 + $0x8] sm:$0xff]
  %v66 = vld [vmem:[%s1 + $0x10] sm:$0xff]
  %v67 = vld [vmem:[%s1 + $0x18] sm:$0xff]
  %v68 = vld [vmem:[%s1 + $0x20] sm:$0xff]
  %v69 = vld [vmem:[%s1 + $0x28] sm:$0xff]
  %v70 = vld [vmem:[%s1 + $0x30] sm:$0xff]
  %v71 = vld [vmem:[%s1 + $0x38] sm:$0xff]
  %v72 = vld [vmem:[%s1 + $0x40] sm:$0xff]
  %v73 = vld [vmem:[%s1 + $0x48] sm:$0xff]
  %v74 = vld [vmem:[%s1 + $0x50] sm:$0xff]
  %v75 = vld [vmem:[%s1 + $0x58] sm:$0xff]
  %v76 = vld [vmem:[%s1 + $0x60] sm:$0xff]
  %v77 = vld [vmem:[%s1 + $0x68] sm:$0xff]
  %v78 = vld [vmem:[%s1 + $0x70] sm:$0xff]
  %v79 = vld [vmem:[%s1 + $0x78] sm:$0xff]
  %v80 = vld [vmem:[%s1 + $0x80] sm:$0xff]
  %v81 = vld [vmem:[%s1 + $0x88] sm:$0xff]
  %v82 = vld [vmem:[%s1 + $0x90] sm:$0xff]
  %v83 = vld [vmem:[%s1 + $0x98] sm:$0xff]
  %v84 = vld [vmem:[%s1 + $0xa0] sm:$0xff]
  %v85 = vld [vmem:[%s1 + $0xa8] sm:$0xff]
  %v86 = vld [vmem:[%s1 + $0xb0] sm:$0xff]
  %v87 = vld [vmem:[%s1 + $0xb8] sm:$0xff]
  %v88 = vld [vmem:[%s1 + $0xc0] sm:$0xff]
  %v89 = vld [vmem:[%s1 + $0xc8] sm:$0xff]
  %v90 = vld [vmem:[%s1 + $0xd0] sm:$0xff]
  %v91 = vld [vmem:[%s1 + $0xd8] sm:$0xff]
  %v92 = vld [vmem:[%s1 + $0xe0] sm:$0xff]
  %v93 = vld [vmem:[%s1 + $0xe8] sm:$0xff]
  %v94 = vld [vmem:[%s1 + $0xf0] sm:$0xff]
  %v95 = vld [vmem:[%s1 + $0xf8] sm:$0xff]
  %96 = vmatprep.subr.mxu0 0.0
  %97 = vmatpush1.msra.mxu0 %v64
  %98 = vmatprep.subr.mxu0 0.0
  %99 = vmatpush1.msra.mxu0 %v65
  %100 = vmatprep.subr.mxu0 0.0
  %101 = vmatpush1.msra.mxu0 %v66
  %102 = vmatprep.subr.mxu0 0.0
  %103 = vmatpush1.msra.mxu0 %v67
  %104 = vmatprep.subr.mxu0 0.0
  %105 = vmatpush1.msra.mxu0 %v68
  %106 = vmatprep.subr.mxu0 0.0
  %107 = vmatpush1.msra.mxu0 %v69
  %108 = vmatprep.subr.mxu0 0.0
  %109 = vmatpush1.msra.mxu0 %v70
  %110 = vmatprep.subr.mxu0 0.0
  %111 = vmatpush1.msra.mxu0 %v71
  %112 = vmatprep.subr.mxu0 0.0
  %113 = vmatpush1.msra.mxu0 %v72
  %114 = vmatprep.subr.mxu0 0.0
  %115 = vmatpush1.msra.mxu0 %v73
  %116 = vmatprep.subr.mxu0 0.0
  %117 = vmatpush1.msra.mxu0 %v74
  %118 = vmatprep.subr.mxu0 0.0
  %119 = vmatpush1.msra.mxu0 %v75
  %120 = vmatprep.subr.mxu0 0.0
  %121 = vmatpush1.msra.mxu0 %v76
  %122 = vmatprep.subr.mxu0 0.0
  %123 = vmatpush1.msra.mxu0 %v77
  %124 = vmatprep.subr.mxu0 0.0
  %125 = vmatpush1.msra.mxu0 %v78
  %126 = vmatprep.subr.mxu0 0.0
  %127 = vmatpush1.msra.mxu0 %v79
  %128 = vmatprep.subr.mxu0 0.0
  %129 = vmatpush1.msra.mxu0 %v80
  %130 = vmatprep.subr.mxu0 0.0
  %131 = vmatpush1.msra.mxu0 %v81
  %132 = vmatprep.subr.mxu0 0.0
  %133 = vmatpush1.msra.mxu0 %v82
  %134 = vmatprep.subr.mxu0 0.0
  %135 = vmatpush1.msra.mxu0 %v83
  %136 = vmatprep.subr.mxu0 0.0
  %137 = vmatpush1.msra.mxu0 %v84
  %138 = vmatprep.subr.mxu0 0.0
  %139 = vmatpush1.msra.mxu0 %v85
  %140 = vmatprep.subr.mxu0 0.0
  %141 = vmatpush1.msra.mxu0 %v86
  %142 = vmatprep.subr.mxu0 0.0
  %143 = vmatpush1.msra.mxu0 %v87
  %144 = vmatprep.subr.mxu0 0.0
  %145 = vmatpush1.msra.mxu0 %v88
  %146 = vmatprep.subr.mxu0 0.0
  %147 = vmatpush1.msra.mxu0 %v89
  %148 = vmatprep.subr.mxu0 0.0
  %149 = vmatpush1.msra.mxu0 %v90
  %150 = vmatprep.subr.mxu0 0.0
  %151 = vmatpush1.msra.mxu0 %v91
  %152 = vmatprep.subr.mxu0 0.0
  %153 = vmatpush1.msra.mxu0 %v92
  %154 = vmatprep.subr.mxu0 0.0
  %155 = vmatpush1.msra.mxu0 %v93
  %156 = vmatprep.subr.mxu0 0.0
  %157 = vmatpush1.msra.mxu0 %v94
  %158 = vmatprep.subr.mxu0 0.0
  %159 = vmatpush1.msra.mxu0 %v95
  %160 = vmatprep.mubr.f32.mxu0 %v33
  %161 = vmatmul.mubr.f32.gmra.mrb[0].mxu0 %v32
  %v162 = vpop.f32.mrb[0].mxu0
  %v163 = vadd.f32 0.0, %v162
  %v164 = vpop.f32.mrb[0].mxu0
  %165 = vmatprep.mubr.f32.mxu0 %v35
  %166 = vmatmul.mubr.f32.gmra.mrb[0].mxu0 %v34
  %v167 = vpop.f32.mrb[0].mxu0
  %v168 = vadd.f32 0.0, %v167
  %v169 = vpop.f32.mrb[0].mxu0
  %170 = vmatprep.mubr.f32.mxu0 %v37
  %171 = vmatmul.mubr.f32.gmra.mrb[0].mxu0 %v36
  %v172 = vpop.f32.mrb[0].mxu0
  %v173 = vadd.f32 0.0, %v172
  %v174 = vpop.f32.mrb[0].mxu0
  %175 = vmatprep.mubr.f32.mxu0 %v39
  %176 = vmatmul.mubr.f32.gmra.mrb[0].mxu0 %v38
  %v177 = vpop.f32.mrb[0].mxu0
  %v178 = vadd.f32 0.0, %v177
  %v179 = vpop.f32.mrb[0].mxu0
  %180 = vmatprep.mubr.f32.mxu0 %v41
  %181 = vmatmul.mubr.f32.gmra.mrb[0].mxu0 %v40
  %v182 = vpop.f32.mrb[0].mxu0
  %v183 = vadd.f32 0.0, %v182
  %v184 = vpop.f32.mrb[0].mxu0
  %185 = vmatprep.mubr.f32.mxu0 %v43
  %186 = vmatmul.mubr.f32.gmra.mrb[0].mxu0 %v42
  %v187 = vpop.f32.mrb[0].mxu0
  %v188 = vadd.f32 0.0, %v187
  %v189 = vpop.f32.mrb[0].mxu0
  %190 = vmatprep.mubr.f32.mxu0 %v45
  %191 = vmatmul.mubr.f32.gmra.mrb[0].mxu0 %v44
  %v192 = vpop.f32.mrb[0].mxu0
  %v193 = vadd.f32 0.0, %v192
  %v194 = vpop.f32.mrb[0].mxu0
  %195 = vmatprep.mubr.f32.mxu0 %v47
  %196 = vmatmul.mubr.f32.gmra.mrb[0].mxu0 %v46
  %v197 = vpop.f32.mrb[0].mxu0
  %v198 = vadd.f32 0.0, %v197
  %v199 = vpop.f32.mrb[0].mxu0
  %200 = vmatprep.mubr.f32.mxu0 %v49
  %201 = vmatmul.mubr.f32.gmra.mrb[0].mxu0 %v48
  %v202 = vpop.f32.mrb[0].mxu0
  %v203 = vadd.f32 0.0, %v202
  %v204 = vpop.f32.mrb[0].mxu0
  %205 = vmatprep.mubr.f32.mxu0 %v51
  %206 = vmatmul.mubr.f32.gmra.mrb[0].mxu0 %v50
  %v207 = vpop.f32.mrb[0].mxu0
  %v208 = vadd.f32 0.0, %v207
  %v209 = vpop.f32.mrb[0].mxu0
  %210 = vmatprep.mubr.f32.mxu0 %v53
  %211 = vmatmul.mubr.f32.gmra.mrb[0].mxu0 %v52
  %v212 = vpop.f32.mrb[0].mxu0
  %v213 = vadd.f32 0.0, %v212
  %v214 = vpop.f32.mrb[0].mxu0
  %215 = vmatprep.mubr.f32.mxu0 %v55
  %216 = vmatmul.mubr.f32.gmra.mrb[0].mxu0 %v54
  %v217 = vpop.f32.mrb[0].mxu0
  %v218 = vadd.f32 0.0, %v217
  %v219 = vpop.f32.mrb[0].mxu0
  %220 = vmatprep.mubr.f32.mxu0 %v57
  %221 = vmatmul.mubr.f32.gmra.mrb[0].mxu0 %v56
  %v222 = vpop.f32.mrb[0].mxu0
  %v223 = vadd.f32 0.0, %v222
  %v224 = vpop.f32.mrb[0].mxu0
  %225 = vmatprep.mubr.f32.mxu0 %v59
  %226 = vmatmul.mubr.f32.gmra.mrb[0].mxu0 %v58
  %v227 = vpop.f32.mrb[0].mxu0
  %v228 = vadd.f32 0.0, %v227
  %v229 = vpop.f32.mrb[0].mxu0
  %230 = vmatprep.mubr.f32.mxu0 %v61
  %231 = vmatmul.mubr.f32.gmra.mrb[0].mxu0 %v60
  %v232 = vpop.f32.mrb[0].mxu0
  %v233 = vadd.f32 0.0, %v232
  %v234 = vpop.f32.mrb[0].mxu0
  %235 = vmatprep.mubr.f32.mxu0 %v63
  %236 = vmatmul.mubr.f32.gmra.mrb[0].mxu0 %v62
  %v237 = vpop.f32.mrb[0].mxu0
  %v238 = vadd.f32 0.0, %v237
  %v239 = vpop.f32.mrb[0].mxu0
  %240 = vdwg.mxu0
  %v241 = vmax.f32 %v163, %v183
  %v242 = vmax.f32 %v168, %v188
  %v243 = vmax.f32 %v173, %v193
  %v244 = vmax.f32 %v178, %v198
  %v245 = vmax.f32 %v203, %v223
  %v246 = vmax.f32 %v208, %v228
  %v247 = vmax.f32 %v213, %v233
  %v248 = vmax.f32 %v218, %v238
  %v249 = vmax.f32 %v241, %v245
  %v250 = vmax.f32 %v242, %v246
  %v251 = vmax.f32 %v243, %v247
  %v252 = vmax.f32 %v244, %v248
  %v253 = vld [vmem:[%s2] sm:$0x1]
  %v255 = vlaneseq
  %v256 = vshrl.u32 %v255, 7
  %v257 = vsub.s32 0, %v256
  %v258 = vrot.slane %v253, %v257
  %v260 = vadd.f32 %v249, %v258
  %v261 = vadd.f32 %v250, %v258
  %v262 = vadd.f32 %v251, %v258
  %v263 = vadd.f32 %v252, %v258
  %v264 = vmax.f32 %v260, 0.0
  %v265 = vmax.f32 %v261, 0.0
  %v266 = vmax.f32 %v262, 0.0
  %v267 = vmax.f32 %v263, 0.0
  %v268 = vld [vmem:[%s3] sm:$0xff]
  %v269 = vld [vmem:[%s3 + $0x8] sm:$0xff]
  %v270 = vld [vmem:[%s3 + $0x10] sm:$0xff]
  %v271 = vld [vmem:[%s3 + $0x18] sm:$0xff]
  %v272 = vld [vmem:[%s3 + $0x20] sm:$0xff]
  %v273 = vld [vmem:[%s3 + $0x28] sm:$0xff]
  %v274 = vld [vmem:[%s3 + $0x30] sm:$0xff]
  %v275 = vld [vmem:[%s3 + $0x38] sm:$0xff]
  %v276 = vld [vmem:[%s3 + $0x40] sm:$0xff]
  %v277 = vld [vmem:[%s3 + $0x48] sm:$0xff]
  %v278 = vld [vmem:[%s3 + $0x50] sm:$0xff]
  %v279 = vld [vmem:[%s3 + $0x58] sm:$0xff]
  %v280 = vld [vmem:[%s3 + $0x60] sm:$0xff]
  %v281 = vld [vmem:[%s3 + $0x68] sm:$0xff]
  %v282 = vld [vmem:[%s3 + $0x70] sm:$0xff]
  %v283 = vld [vmem:[%s3 + $0x78] sm:$0xff]
  %v284 = vld [vmem:[%s3 + $0x80] sm:$0xff]
  %v285 = vld [vmem:[%s3 + $0x88] sm:$0xff]
  %v286 = vld [vmem:[%s3 + $0x90] sm:$0xff]
  %v287 = vld [vmem:[%s3 + $0x98] sm:$0xff]
  %v288 = vld [vmem:[%s3 + $0xa0] sm:$0xff]
  %v289 = vld [vmem:[%s3 + $0xa8] sm:$0xff]
  %v290 = vld [vmem:[%s3 + $0xb0] sm:$0xff]
  %v291 = vld [vmem:[%s3 + $0xb8] sm:$0xff]
  %v292 = vld [vmem:[%s3 + $0xc0] sm:$0xff]
  %v293 = vld [vmem:[%s3 + $0xc8] sm:$0xff]
  %v294 = vld [vmem:[%s3 + $0xd0] sm:$0xff]
  %v295 = vld [vmem:[%s3 + $0xd8] sm:$0xff]
  %v296 = vld [vmem:[%s3 + $0xe0] sm:$0xff]
  %v297 = vld [vmem:[%s3 + $0xe8] sm:$0xff]
  %v298 = vld [vmem:[%s3 + $0xf0] sm:$0xff]
  %v299 = vld [vmem:[%s3 + $0xf8] sm:$0xff]
  %v300 = vld [vmem:[%s3 + $0x100] sm:$0xff]
  %v301 = vld [vmem:[%s3 + $0x108] sm:$0xff]
  %v302 = vld [vmem:[%s3 + $0x110] sm:$0xff]
  %v303 = vld [vmem:[%s3 + $0x118] sm:$0xff]
  %v304 = vld [vmem:[%s3 + $0x120] sm:$0xff]
  %v305 = vld [vmem:[%s3 + $0x128] sm:$0xff]
  %v306 = vld [vmem:[%s3 + $0x130] sm:$0xff]
  %v307 = vld [vmem:[%s3 + $0x138] sm:$0xff]
  %v308 = vld [vmem:[%s3 + $0x140] sm:$0xff]
  %v309 = vld [vmem:[%s3 + $0x148] sm:$0xff]
  %v310 = vld [vmem:[%s3 + $0x150] sm:$0xff]
  %v311 = vld [vmem:[%s3 + $0x158] sm:$0xff]
  %v312 = vld [vmem:[%s3 + $0x160] sm:$0xff]
  %v313 = vld [vmem:[%s3 + $0x168] sm:$0xff]
  %v314 = vld [vmem:[%s3 + $0x170] sm:$0xff]
  %v315 = vld [vmem:[%s3 + $0x178] sm:$0xff]
  %v316 = vld [vmem:[%s3 + $0x180] sm:$0xff]
  %v317 = vld [vmem:[%s3 + $0x188] sm:$0xff]
  %v318 = vld [vmem:[%s3 + $0x190] sm:$0xff]
  %v319 = vld [vmem:[%s3 + $0x198] sm:$0xff]
  %v320 = vld [vmem:[%s3 + $0x1a0] sm:$0xff]
  %v321 = vld [vmem:[%s3 + $0x1a8] sm:$0xff]
  %v322 = vld [vmem:[%s3 + $0x1b0] sm:$0xff]
  %v323 = vld [vmem:[%s3 + $0x1b8] sm:$0xff]
  %v324 = vld [vmem:[%s3 + $0x1c0] sm:$0xff]
  %v325 = vld [vmem:[%s3 + $0x1c8] sm:$0xff]
  %v326 = vld [vmem:[%s3 + $0x1d0] sm:$0xff]
  %v327 = vld [vmem:[%s3 + $0x1d8] sm:$0xff]
  %v328 = vld [vmem:[%s3 + $0x1e0] sm:$0xff]
  %v329 = vld [vmem:[%s3 + $0x1e8] sm:$0xff]
  %v330 = vld [vmem:[%s3 + $0x1f0] sm:$0xff]
  %v331 = vld [vmem:[%s3 + $0x1f8] sm:$0xff]
  %332 = vmatprep.subr.mxu0 0.0
  %333 = vmatpush1.msra.mxu0 %v284
  %334 = vmatprep.subr.mxu0 0.0
  %335 = vmatpush1.msra.mxu0 %v285
  %336 = vmatprep.subr.mxu0 0.0
  %337 = vmatpush1.msra.mxu0 %v286
  %338 = vmatprep.subr.mxu0 0.0
  %339 = vmatpush1.msra.mxu0 %v287
  %340 = vmatprep.subr.mxu0 0.0
  %341 = vmatpush1.msra.mxu0 %v288
  %342 = vmatprep.subr.mxu0 0.0
  %343 = vmatpush1.msra.mxu0 %v289
  %344 = vmatprep.subr.mxu0 0.0
  %345 = vmatpush1.msra.mxu0 %v290
  %346 = vmatprep.subr.mxu0 0.0
  %347 = vmatpush1.msra.mxu0 %v291
  %348 = vmatprep.subr.mxu0 0.0
  %349 = vmatpush1.msra.mxu0 %v292
  %350 = vmatprep.subr.mxu0 0.0
  %351 = vmatpush1.msra.mxu0 %v293
  %352 = vmatprep.subr.mxu0 0.0
  %353 = vmatpush1.msra.mxu0 %v294
  %354 = vmatprep.subr.mxu0 0.0
  %355 = vmatpush1.msra.mxu0 %v295
  %356 = vmatprep.subr.mxu0 0.0
  %357 = vmatpush1.msra.mxu0 %v296
  %358 = vmatprep.subr.mxu0 0.0
  %359 = vmatpush1.msra.mxu0 %v297
  %360 = vmatprep.subr.mxu0 0.0
  %361 = vmatpush1.msra.mxu0 %v298
  %362 = vmatprep.subr.mxu0 0.0
  %363 = vmatpush1.msra.mxu0 %v299
  %364 = vmatprep.subr.mxu0 0.0
  %365 = vmatpush1.msra.mxu0 0.0
  %366 = vmatprep.subr.mxu0 0.0
  %367 = vmatpush1.msra.mxu0 0.0
  %368 = vmatprep.subr.mxu0 0.0
  %369 = vmatpush1.msra.mxu0 0.0
  %370 = vmatprep.subr.mxu0 0.0
  %371 = vmatpush1.msra.mxu0 0.0
  %372 = vmatprep.subr.mxu0 0.0
  %373 = vmatpush1.msra.mxu0 0.0
  %374 = vmatprep.subr.mxu0 0.0
  %375 = vmatpush1.msra.mxu0 0.0
  %376 = vmatprep.subr.mxu0 0.0
  %377 = vmatpush1.msra.mxu0 0.0
  %378 = vmatprep.subr.mxu0 0.0
  %379 = vmatpush1.msra.mxu0 0.0
  %380 = vmatprep.subr.mxu0 0.0
  %381 = vmatpush1.msra.mxu0 0.0
  %382 = vmatprep.subr.mxu0 0.0
  %383 = vmatpush1.msra.mxu0 0.0
  %384 = vmatprep.subr.mxu0 0.0
  %385 = vmatpush1.msra.mxu0 0.0
  %386 = vmatprep.subr.mxu0 0.0
  %387 = vmatpush1.msra.mxu0 0.0
  %388 = vmatprep.subr.mxu0 0.0
  %389 = vmatpush1.msra.mxu0 0.0
  %390 = vmatprep.subr.mxu0 0.0
  %391 = vmatpush1.msra.mxu0 0.0
  %392 = vmatprep.subr.mxu0 0.0
  %393 = vmatpush1.msra.mxu0 0.0
  %394 = vmatprep.subr.mxu0 0.0
  %395 = vmatpush1.msra.mxu0 0.0
  %396 = vmatprep.mubr.f32.mxu0 0.0
  %397 = vmatmul.mubr.f32.gmra.mrb[0].mxu0 %v265
  %v398 = vpop.f32.mrb[0].mxu0
  %v399 = vadd.f32 0.0, %v398
  %v400 = vpop.f32.mrb[0].mxu0
  %401 = vdwg.mxu0
  %402 = vmatprep.subr.mxu0 0.0
  %403 = vmatpush1.msra.mxu0 %v268
  %404 = vmatprep.subr.mxu0 0.0
  %405 = vmatpush1.msra.mxu0 %v269
  %406 = vmatprep.subr.mxu0 0.0
  %407 = vmatpush1.msra.mxu0 %v270
  %408 = vmatprep.subr.mxu0 0.0
  %409 = vmatpush1.msra.mxu0 %v271
  %410 = vmatprep.subr.mxu0 0.0
  %411 = vmatpush1.msra.mxu0 %v272
  %412 = vmatprep.subr.mxu0 0.0
  %413 = vmatpush1.msra.mxu0 %v273
  %414 = vmatprep.subr.mxu0 0.0
  %415 = vmatpush1.msra.mxu0 %v274
  %416 = vmatprep.subr.mxu0 0.0
  %417 = vmatpush1.msra.mxu0 %v275
  %418 = vmatprep.subr.mxu0 0.0
  %419 = vmatpush1.msra.mxu0 %v276
  %420 = vmatprep.subr.mxu0 0.0
  %421 = vmatpush1.msra.mxu0 %v277
  %422 = vmatprep.subr.mxu0 0.0
  %423 = vmatpush1.msra.mxu0 %v278
  %424 = vmatprep.subr.mxu0 0.0
  %425 = vmatpush1.msra.mxu0 %v279
  %426 = vmatprep.subr.mxu0 0.0
  %427 = vmatpush1.msra.mxu0 %v280
  %428 = vmatprep.subr.mxu0 0.0
  %429 = vmatpush1.msra.mxu0 %v281
  %430 = vmatprep.subr.mxu0 0.0
  %431 = vmatpush1.msra.mxu0 %v282
  %432 = vmatprep.subr.mxu0 0.0
  %433 = vmatpush1.msra.mxu0 %v283
  %434 = vmatprep.subr.mxu0 0.0
  %435 = vmatpush1.msra.mxu0 0.0
  %436 = vmatprep.subr.mxu0 0.0
  %437 = vmatpush1.msra.mxu0 0.0
  %438 = vmatprep.subr.mxu0 0.0
  %439 = vmatpush1.msra.mxu0 0.0
  %440 = vmatprep.subr.mxu0 0.0
  %441 = vmatpush1.msra.mxu0 0.0
  %442 = vmatprep.subr.mxu0 0.0
  %443 = vmatpush1.msra.mxu0 0.0
  %444 = vmatprep.subr.mxu0 0.0
  %445 = vmatpush1.msra.mxu0 0.0
  %446 = vmatprep.subr.mxu0 0.0
  %447 = vmatpush1.msra.mxu0 0.0
  %448 = vmatprep.subr.mxu0 0.0
  %449 = vmatpush1.msra.mxu0 0.0
  %450 = vmatprep.subr.mxu0 0.0
  %451 = vmatpush1.msra.mxu0 0.0
  %452 = vmatprep.subr.mxu0 0.0
  %453 = vmatpush1.msra.mxu0 0.0
  %454 = vmatprep.subr.mxu0 0.0
  %455 = vmatpush1.msra.mxu0 0.0
  %456 = vmatprep.subr.mxu0 0.0
  %457 = vmatpush1.msra.mxu0 0.0
  %458 = vmatprep.subr.mxu0 0.0
  %459 = vmatpush1.msra.mxu0 0.0
  %460 = vmatprep.subr.mxu0 0.0
  %461 = vmatpush1.msra.mxu0 0.0
  %462 = vmatprep.subr.mxu0 0.0
  %463 = vmatpush1.msra.mxu0 0.0
  %464 = vmatprep.subr.mxu0 0.0
  %465 = vmatpush1.msra.mxu0 0.0
  %466 = vmatprep.mubr.f32.mxu0 0.0
  %467 = vmatmul.mubr.f32.gmra.mrb[0].mxu0 %v264
  %v468 = vpop.f32.mrb[0].mxu0
  %v469 = vadd.f32 %v399, %v468
  %v470 = vpop.f32.mrb[0].mxu0
  %471 = vdwg.mxu0
  %472 = vmatprep.subr.mxu0 0.0
  %473 = vmatpush1.msra.mxu0 %v300
  %474 = vmatprep.subr.mxu0 0.0
  %475 = vmatpush1.msra.mxu0 %v301
  %476 = vmatprep.subr.mxu0 0.0
  %477 = vmatpush1.msra.mxu0 %v302
  %478 = vmatprep.subr.mxu0 0.0
  %479 = vmatpush1.msra.mxu0 %v303
  %480 = vmatprep.subr.mxu0 0.0
  %481 = vmatpush1.msra.mxu0 %v304
  %482 = vmatprep.subr.mxu0 0.0
  %483 = vmatpush1.msra.mxu0 %v305
  %484 = vmatprep.subr.mxu0 0.0
  %485 = vmatpush1.msra.mxu0 %v306
  %486 = vmatprep.subr.mxu0 0.0
  %487 = vmatpush1.msra.mxu0 %v307
  %488 = vmatprep.subr.mxu0 0.0
  %489 = vmatpush1.msra.mxu0 %v308
  %490 = vmatprep.subr.mxu0 0.0
  %491 = vmatpush1.msra.mxu0 %v309
  %492 = vmatprep.subr.mxu0 0.0
  %493 = vmatpush1.msra.mxu0 %v310
  %494 = vmatprep.subr.mxu0 0.0
  %495 = vmatpush1.msra.mxu0 %v311
  %496 = vmatprep.subr.mxu0 0.0
  %497 = vmatpush1.msra.mxu0 %v312
  %498 = vmatprep.subr.mxu0 0.0
  %499 = vmatpush1.msra.mxu0 %v313
  %500 = vmatprep.subr.mxu0 0.0
  %501 = vmatpush1.msra.mxu0 %v314
  %502 = vmatprep.subr.mxu0 0.0
  %503 = vmatpush1.msra.mxu0 %v315
  %504 = vmatprep.subr.mxu0 0.0
  %505 = vmatpush1.msra.mxu0 0.0
  %506 = vmatprep.subr.mxu0 0.0
  %507 = vmatpush1.msra.mxu0 0.0
  %508 = vmatprep.subr.mxu0 0.0
  %509 = vmatpush1.msra.mxu0 0.0
  %510 = vmatprep.subr.mxu0 0.0
  %511 = vmatpush1.msra.mxu0 0.0
  %512 = vmatprep.subr.mxu0 0.0
  %513 = vmatpush1.msra.mxu0 0.0
  %514 = vmatprep.subr.mxu0 0.0
  %515 = vmatpush1.msra.mxu0 0.0
  %516 = vmatprep.subr.mxu0 0.0
  %517 = vmatpush1.msra.mxu0 0.0
  %518 = vmatprep.subr.mxu0 0.0
  %519 = vmatpush1.msra.mxu0 0.0
  %520 = vmatprep.subr.mxu0 0.0
  %521 = vmatpush1.msra.mxu0 0.0
  %522 = vmatprep.subr.mxu0 0.0
  %523 = vmatpush1.msra.mxu0 0.0
  %524 = vmatprep.subr.mxu0 0.0
  %525 = vmatpush1.msra.mxu0 0.0
  %526 = vmatprep.subr.mxu0 0.0
  %527 = vmatpush1.msra.mxu0 0.0
  %528 = vmatprep.subr.mxu0 0.0
  %529 = vmatpush1.msra.mxu0 0.0
  %530 = vmatprep.subr.mxu0 0.0
  %531 = vmatpush1.msra.mxu0 0.0
  %532 = vmatprep.subr.mxu0 0.0
  %533 = vmatpush1.msra.mxu0 0.0
  %534 = vmatprep.subr.mxu0 0.0
  %535 = vmatpush1.msra.mxu0 0.0
  %536 = vmatprep.mubr.f32.mxu0 0.0
  %537 = vmatmul.mubr.f32.gmra.mrb[0].mxu0 %v266
  %v538 = vpop.f32.mrb[0].mxu0
  %v539 = vadd.f32 0.0, %v538
  %v540 = vpop.f32.mrb[0].mxu0
  %541 = vdwg.mxu0
  %v542 = vadd.f32 %v469, %v539
  %543 = vmatprep.subr.mxu0 0.0
  %544 = vmatpush1.msra.mxu0 %v316
  %545 = vmatprep.subr.mxu0 0.0
  %546 = vmatpush1.msra.mxu0 %v317
  %547 = vmatprep.subr.mxu0 0.0
  %548 = vmatpush1.msra.mxu0 %v318
  %549 = vmatprep.subr.mxu0 0.0
  %550 = vmatpush1.msra.mxu0 %v319
  %551 = vmatprep.subr.mxu0 0.0
  %552 = vmatpush1.msra.mxu0 %v320
  %553 = vmatprep.subr.mxu0 0.0
  %554 = vmatpush1.msra.mxu0 %v321
  %555 = vmatprep.subr.mxu0 0.0
  %556 = vmatpush1.msra.mxu0 %v322
  %557 = vmatprep.subr.mxu0 0.0
  %558 = vmatpush1.msra.mxu0 %v323
  %559 = vmatprep.subr.mxu0 0.0
  %560 = vmatpush1.msra.mxu0 %v324
  %561 = vmatprep.subr.mxu0 0.0
  %562 = vmatpush1.msra.mxu0 %v325
  %563 = vmatprep.subr.mxu0 0.0
  %564 = vmatpush1.msra.mxu0 %v326
  %565 = vmatprep.subr.mxu0 0.0
  %566 = vmatpush1.msra.mxu0 %v327
  %567 = vmatprep.subr.mxu0 0.0
  %568 = vmatpush1.msra.mxu0 %v328
  %569 = vmatprep.subr.mxu0 0.0
  %570 = vmatpush1.msra.mxu0 %v329
  %571 = vmatprep.subr.mxu0 0.0
  %572 = vmatpush1.msra.mxu0 %v330
  %573 = vmatprep.subr.mxu0 0.0
  %574 = vmatpush1.msra.mxu0 %v331
  %575 = vmatprep.subr.mxu0 0.0
  %576 = vmatpush1.msra.mxu0 0.0
  %577 = vmatprep.subr.mxu0 0.0
  %578 = vmatpush1.msra.mxu0 0.0
  %579 = vmatprep.subr.mxu0 0.0
  %580 = vmatpush1.msra.mxu0 0.0
  %581 = vmatprep.subr.mxu0 0.0
  %582 = vmatpush1.msra.mxu0 0.0
  %583 = vmatprep.subr.mxu0 0.0
  %584 = vmatpush1.msra.mxu0 0.0
  %585 = vmatprep.subr.mxu0 0.0
  %586 = vmatpush1.msra.mxu0 0.0
  %587 = vmatprep.subr.mxu0 0.0
  %588 = vmatpush1.msra.mxu0 0.0
  %589 = vmatprep.subr.mxu0 0.0
  %590 = vmatpush1.msra.mxu0 0.0
  %591 = vmatprep.subr.mxu0 0.0
  %592 = vmatpush1.msra.mxu0 0.0
  %593 = vmatprep.subr.mxu0 0.0
  %594 = vmatpush1.msra.mxu0 0.0
  %595 = vmatprep.subr.mxu0 0.0
  %596 = vmatpush1.msra.mxu0 0.0
  %597 = vmatprep.subr.mxu0 0.0
  %598 = vmatpush1.msra.mxu0 0.0
  %599 = vmatprep.subr.mxu0 0.0
  %600 = vmatpush1.msra.mxu0 0.0
  %601 = vmatprep.subr.mxu0 0.0
  %602 = vmatpush1.msra.mxu0 0.0
  %603 = vmatprep.subr.mxu0 0.0
  %604 = vmatpush1.msra.mxu0 0.0
  %605 = vmatprep.subr.mxu0 0.0
  %606 = vmatpush1.msra.mxu0 0.0
  %607 = vmatprep.mubr.f32.mxu0 0.0
  %608 = vmatmul.mubr.f32.gmra.mrb[0].mxu0 %v267
  %v609 = vpop.f32.mrb[0].mxu0
  %v610 = vadd.f32 0.0, %v609
  %v611 = vpop.f32.mrb[0].mxu0
  %612 = vdwg.mxu0
  %v613 = vadd.f32 %v542, %v610
  %v614 = vld [vmem:[%s4] sm:$0x1]
  %v616 = vlaneseq
  %v617 = vshrl.u32 %v616, 7
  %v618 = vsub.s32 0, %v617
  %v619 = vrot.slane %v614, %v618
  %v621 = vadd.f32 %v613, %v619
  %v622 = vmax.f32 %v621, 0.0
  %v623 = vld [vmem:[%s5] sm:$0xff]
  %v624 = vld [vmem:[%s5 + $0x8] sm:$0xff]
  %v625 = vld [vmem:[%s5 + $0x10] sm:$0xff]
  %v626 = vld [vmem:[%s5 + $0x18] sm:$0xff]
  %v627 = vld [vmem:[%s5 + $0x20] sm:$0xff]
  %v628 = vld [vmem:[%s5 + $0x28] sm:$0xff]
  %v629 = vld [vmem:[%s5 + $0x30] sm:$0xff]
  %v630 = vld [vmem:[%s5 + $0x38] sm:$0xff]
  %v631 = vld [vmem:[%s5 + $0x40] sm:$0xff]
  %v632 = vld [vmem:[%s5 + $0x48] sm:$0xff]
  %v633 = vld [vmem:[%s5 + $0x50] sm:$0xff]
  %v634 = vld [vmem:[%s5 + $0x58] sm:$0xff]
  %v635 = vld [vmem:[%s5 + $0x60] sm:$0xff]
  %v636 = vld [vmem:[%s5 + $0x68] sm:$0xff]
  %v637 = vld [vmem:[%s5 + $0x70] sm:$0xff]
  %v638 = vld [vmem:[%s5 + $0x78] sm:$0xff]
  %v639 = vld [vmem:[%s6] sm:$0x1]
  %v641 = vlaneseq
  %v642 = vshrl.u32 %v641, 7
  %v643 = vsub.s32 0, %v642
  %v644 = vrot.slane %v639, %v643
  %646 = vmatprep.subr.mxu0 0.0
  %647 = vmatpush1.msra.mxu0 %v623
  %648 = vmatprep.subr.mxu0 0.0
  %649 = vmatpush1.msra.mxu0 %v624
  %650 = vmatprep.subr.mxu0 0.0
  %651 = vmatpush1.msra.mxu0 %v625
  %652 = vmatprep.subr.mxu0 0.0
  %653 = vmatpush1.msra.mxu0 %v626
  %654 = vmatprep.subr.mxu0 0.0
  %655 = vmatpush1.msra.mxu0 %v627
  %656 = vmatprep.subr.mxu0 0.0
  %657 = vmatpush1.msra.mxu0 %v628
  %658 = vmatprep.subr.mxu0 0.0
  %659 = vmatpush1.msra.mxu0 %v629
  %660 = vmatprep.subr.mxu0 0.0
  %661 = vmatpush1.msra.mxu0 %v630
  %662 = vmatprep.subr.mxu0 0.0
  %663 = vmatpush1.msra.mxu0 %v631
  %664 = vmatprep.subr.mxu0 0.0
  %665 = vmatpush1.msra.mxu0 %v632
  %666 = vmatprep.subr.mxu0 0.0
  %667 = vmatpush1.msra.mxu0 %v633
  %668 = vmatprep.subr.mxu0 0.0
  %669 = vmatpush1.msra.mxu0 %v634
  %670 = vmatprep.subr.mxu0 0.0
  %671 = vmatpush1.msra.mxu0 %v635
  %672 = vmatprep.subr.mxu0 0.0
  %673 = vmatpush1.msra.mxu0 %v636
  %674 = vmatprep.subr.mxu0 0.0
  %675 = vmatpush1.msra.mxu0 %v637
  %676 = vmatprep.subr.mxu0 0.0
  %677 = vmatpush1.msra.mxu0 %v638
  %678 = vmatprep.subr.mxu0 0.0
  %679 = vmatpush1.msra.mxu0 0.0
  %680 = vmatprep.subr.mxu0 0.0
  %681 = vmatpush1.msra.mxu0 0.0
  %682 = vmatprep.subr.mxu0 0.0
  %683 = vmatpush1.msra.mxu0 0.0
  %684 = vmatprep.subr.mxu0 0.0
  %685 = vmatpush1.msra.mxu0 0.0
  %686 = vmatprep.subr.mxu0 0.0
  %687 = vmatpush1.msra.mxu0 0.0
  %688 = vmatprep.subr.mxu0 0.0
  %689 = vmatpush1.msra.mxu0 0.0
  %690 = vmatprep.subr.mxu0 0.0
  %691 = vmatpush1.msra.mxu0 0.0
  %692 = vmatprep.subr.mxu0 0.0
  %693 = vmatpush1.msra.mxu0 0.0
  %694 = vmatprep.subr.mxu0 0.0
  %695 = vmatpush1.msra.mxu0 0.0
  %696 = vmatprep.subr.mxu0 0.0
  %697 = vmatpush1.msra.mxu0 0.0
  %698 = vmatprep.subr.mxu0 0.0
  %699 = vmatpush1.msra.mxu0 0.0
  %700 = vmatprep.subr.mxu0 0.0
  %701 = vmatpush1.msra.mxu0 0.0
  %702 = vmatprep.subr.mxu0 0.0
  %703 = vmatpush1.msra.mxu0 0.0
  %704 = vmatprep.subr.mxu0 0.0
  %705 = vmatpush1.msra.mxu0 0.0
  %706 = vmatprep.subr.mxu0 0.0
  %707 = vmatpush1.msra.mxu0 0.0
  %708 = vmatprep.subr.mxu0 0.0
  %709 = vmatpush1.msra.mxu0 0.0
  %710 = vmatprep.mubr.f32.mxu0 0.0
  %711 = vmatmul.mubr.f32.gmra.mrb[0].mxu0 %v622
  %v712 = vpop.f32.mrb[0].mxu0
  %v713 = vadd.f32 %v644, %v712
  %v714 = vpop.f32.mrb[0].mxu0
  %715 = vdwg.mxu0
  %v716 = vmax.f32 %v713, 0.0
  %v717 = vld [vmem:[%s7] sm:$0xff]
  %v718 = vld [vmem:[%s7 + $0x8] sm:$0xff]
  %v719 = vld [vmem:[%s7 + $0x10] sm:$0xff]
  %v720 = vld [vmem:[%s7 + $0x18] sm:$0xff]
  %v721 = vld [vmem:[%s7 + $0x20] sm:$0xff]
  %v722 = vld [vmem:[%s7 + $0x28] sm:$0xff]
  %v723 = vld [vmem:[%s7 + $0x30] sm:$0xff]
  %v724 = vld [vmem:[%s7 + $0x38] sm:$0xff]
  %v725 = vld [vmem:[%s7 + $0x40] sm:$0xff]
  %v726 = vld [vmem:[%s7 + $0x48] sm:$0xff]
  %v727 = vld [vmem:[%s7 + $0x50] sm:$0xff]
  %v728 = vld [vmem:[%s7 + $0x58] sm:$0xff]
  %v729 = vld [vmem:[%s7 + $0x60] sm:$0xff]
  %v730 = vld [vmem:[%s7 + $0x68] sm:$0xff]
  %v731 = vld [vmem:[%s7 + $0x70] sm:$0xff]
  %v732 = vld [vmem:[%s7 + $0x78] sm:$0xff]
  %v733 = vld [vmem:[%s8] sm:$0x1]
  %v735 = vlaneseq
  %v736 = vshrl.u32 %v735, 7
  %v737 = vsub.s32 0, %v736
  %v738 = vrot.slane %v733, %v737
  %740 = vmatprep.subr.mxu0 0.0
  %741 = vmatpush1.msra.mxu0 %v717
  %742 = vmatprep.subr.mxu0 0.0
  %743 = vmatpush1.msra.mxu0 %v718
  %744 = vmatprep.subr.mxu0 0.0
  %745 = vmatpush1.msra.mxu0 %v719
  %746 = vmatprep.subr.mxu0 0.0
  %747 = vmatpush1.msra.mxu0 %v720
  %748 = vmatprep.subr.mxu0 0.0
  %749 = vmatpush1.msra.mxu0 %v721
  %750 = vmatprep.subr.mxu0 0.0
  %751 = vmatpush1.msra.mxu0 %v722
  %752 = vmatprep.subr.mxu0 0.0
  %753 = vmatpush1.msra.mxu0 %v723
  %754 = vmatprep.subr.mxu0 0.0
  %755 = vmatpush1.msra.mxu0 %v724
  %756 = vmatprep.subr.mxu0 0.0
  %757 = vmatpush1.msra.mxu0 %v725
  %758 = vmatprep.subr.mxu0 0.0
  %759 = vmatpush1.msra.mxu0 %v726
  %760 = vmatprep.subr.mxu0 0.0
  %761 = vmatpush1.msra.mxu0 %v727
  %762 = vmatprep.subr.mxu0 0.0
  %763 = vmatpush1.msra.mxu0 %v728
  %764 = vmatprep.subr.mxu0 0.0
  %765 = vmatpush1.msra.mxu0 %v729
  %766 = vmatprep.subr.mxu0 0.0
  %767 = vmatpush1.msra.mxu0 %v730
  %768 = vmatprep.subr.mxu0 0.0
  %769 = vmatpush1.msra.mxu0 %v731
  %770 = vmatprep.subr.mxu0 0.0
  %771 = vmatpush1.msra.mxu0 %v732
  %772 = vmatprep.subr.mxu0 0.0
  %773 = vmatpush1.msra.mxu0 0.0
  %774 = vmatprep.subr.mxu0 0.0
  %775 = vmatpush1.msra.mxu0 0.0
  %776 = vmatprep.subr.mxu0 0.0
  %777 = vmatpush1.msra.mxu0 0.0
  %778 = vmatprep.subr.mxu0 0.0
  %779 = vmatpush1.msra.mxu0 0.0
  %780 = vmatprep.subr.mxu0 0.0
  %781 = vmatpush1.msra.mxu0 0.0
  %782 = vmatprep.subr.mxu0 0.0
  %783 = vmatpush1.msra.mxu0 0.0
  %784 = vmatprep.subr.mxu0 0.0
  %785 = vmatpush1.msra.mxu0 0.0
  %786 = vmatprep.subr.mxu0 0.0
  %787 = vmatpush1.msra.mxu0 0.0
  %788 = vmatprep.subr.mxu0 0.0
  %789 = vmatpush1.msra.mxu0 0.0
  %790 = vmatprep.subr.mxu0 0.0
  %791 = vmatpush1.msra.mxu0 0.0
  %792 = vmatprep.subr.mxu0 0.0
  %793 = vmatpush1.msra.mxu0 0.0
  %794 = vmatprep.subr.mxu0 0.0
  %795 = vmatpush1.msra.mxu0 0.0
  %796 = vmatprep.subr.mxu0 0.0
  %797 = vmatpush1.msra.mxu0 0.0
  %798 = vmatprep.subr.mxu0 0.0
  %799 = vmatpush1.msra.mxu0 0.0
  %800 = vmatprep.subr.mxu0 0.0
  %801 = vmatpush1.msra.mxu0 0.0
  %802 = vmatprep.subr.mxu0 0.0
  %803 = vmatpush1.msra.mxu0 0.0
  %804 = vmatprep.mubr.f32.mxu0 0.0
  %805 = vmatmul.mubr.f32.gmra.mrb[0].mxu0 %v716
  %v806 = vpop.f32.mrb[0].mxu0
  %v807 = vadd.f32 %v738, %v806
  %v808 = vpop.f32.mrb[0].mxu0
  %809 = vdwg.mxu0
  %810 = vst [vmem:[%s9] sm:$0xff] %v807
  // Predicated region
  $region38: #{digit_cnn_forward.3} parent=0 // pred_check
    _
  $region39: #{digit_cnn_forward.3} parent=0 // pred_check_branch
    %812 = sbr.rel (0) target = $region41
  $region40: #{digit_cnn_forward.3} parent=0 // pred_region
    _
  $region41: #{digit_cnn_forward.3} parent=0 // pred_fallthru
    _
  // Predicated region
  $region42: #{digit_cnn_forward.3} parent=0 // pred_check
    _
  $region43: #{digit_cnn_forward.3} parent=0 // pred_check_branch
    %814 = sbr.rel (0) target = $region45
  $region44: #{digit_cnn_forward.3} parent=0 // pred_region
    _
  $region45: #{digit_cnn_forward.3} parent=0 // pred_fallthru
    _

</llo_original>
